<compile_context>
chip_gen: v5e
topology: v5e:2x2
jax: 0.10.0
libtpu: 0.0.40
codegen_flags: <defaults>
</compile_context>

<pallas_src>
import math
import functools

import jax
import jax.numpy as jnp
from jax.experimental import pallas as pl
from jax.experimental.pallas import tpu as pltpu


# ---------------------------------------------------------------------------
# Fused kernel: MHA(q=x, k=y, v=y) + fusion MLP on cat([x, y_att]) in one call
# ---------------------------------------------------------------------------
def _ln_lrelu(h, gamma, beta, eps=1e-5, slope=0.01):
    # LayerNorm (biased var, eps=1e-5) + LeakyReLU(0.01), matching PyTorch defaults. All f32.
    mu = jnp.mean(h, axis=-1, keepdims=True)
    var = jnp.mean((h - mu) * (h - mu), axis=-1, keepdims=True)
    hn = (h - mu) * jax.lax.rsqrt(var + eps)
    hn = hn * gamma + beta
    return jnp.where(hn > 0, hn, slope * hn)


def _fusion_attention_kernel(
    x_ref, y_ref,
    wq_ref, bq_ref, wkv_ref, bkv_ref, wo_ref, bo_ref,
    wh_ref, bh_ref, gh_ref, bth_ref, wout_ref, bout_ref,
    o_ref,
    *, n_head,
):
    bf16 = jnp.bfloat16
    bt, sq, d = x_ref.shape
    sk = y_ref.shape[1]
    dh = d // n_head

    # Fold batch into the matmul M dimension (sublane-aligned merges: sq, sk multiples of 8).
    x2 = x_ref[...].reshape(bt * sq, d)                 # [M, D]  f32
    y2 = y_ref[...].reshape(bt * sk, d)                 # [Mk, D] f32

    # --- fused Q and K|V projections (one MXU push each, bf16 operands, f32 accum) ---
    # 1/sqrt(dh) already folded into wq/bq at parameter-prep time.
    q2 = jnp.dot(x2.astype(bf16), wq_ref[...],
                 preferred_element_type=jnp.float32) + bq_ref[...]        # [M, D]
    kv2 = jnp.dot(y2.astype(bf16), wkv_ref[...],
                  preferred_element_type=jnp.float32) + bkv_ref[...]      # [Mk, 2D]

    q = q2.reshape(bt, sq, d).astype(bf16)
    k = kv2[:, :d].reshape(bt, sk, d).astype(bf16)
    v = kv2[:, d:].reshape(bt, sk, d).astype(bf16)

    # --- per-head attention, batched over the batch-tile via einsum; softmax in f32 ---
    # TODO(synk): for large n_head convert to lax.fori_loop(..., unroll=True) with pl.ds offsets.
    head_outs = []
    for h in range(n_head):
        lo = h * dh
        qh = q[:, :, lo:lo + dh]                        # [bt, sq, dh]
        kh = k[:, :, lo:lo + dh]                        # [bt, sk, dh]
        vh = v[:, :, lo:lo + dh]                        # [bt, sk, dh]
        s = jnp.einsum("bqd,bkd->bqk", qh, kh,
                       preferred_element_type=jnp.float32)                # [bt, sq, sk]
        m = jnp.max(s, axis=-1, keepdims=True)
        p = jnp.exp(s - m)
        p = p * pl.reciprocal(jnp.sum(p, axis=-1, keepdims=True), approx=True)
        oh = jnp.einsum("bqk,bkd->bqd", p.astype(bf16), vh,
                        preferred_element_type=jnp.float32)               # [bt, sq, dh]
        head_outs.append(oh)

    # Single full-width output projection (K = D contraction, one MXU push; no per-head matmuls).
    o_cat = jnp.concatenate(head_outs, axis=-1).reshape(bt * sq, d)       # [M, D]
    y_att = jnp.dot(o_cat.astype(bf16), wo_ref[...],
                    preferred_element_type=jnp.float32) + bo_ref[...]     # [M, D]

    # --- fusion MLP on cat([x, y_att], -1); concat folded into the first matmul ---
    num_hidden = wh_ref.shape[0]
    w0 = wh_ref[0]                                      # [2D, 2D] bf16
    h_act = (jnp.dot(x2.astype(bf16), w0[:d, :], preferred_element_type=jnp.float32)
             + jnp.dot(y_att.astype(bf16), w0[d:, :], preferred_element_type=jnp.float32)
             + bh_ref[0])
    h_act = _ln_lrelu(h_act, gh_ref[0], bth_ref[0])
    for l in range(1, num_hidden):
        h_act = (jnp.dot(h_act.astype(bf16), wh_ref[l],
                         preferred_element_type=jnp.float32) + bh_ref[l])
        h_act = _ln_lrelu(h_act, gh_ref[l], bth_ref[l])
    out = (jnp.dot(h_act.astype(bf16), wout_ref[...],
                   preferred_element_type=jnp.float32) + bout_ref[...])   # [M, D]

    # Dropout(p=0.1) -> identity (inference/eval semantics).
    # TODO(synk): training-mode dropout would need pltpu.prng_seed + stateful_bernoulli.
    o_ref[...] = out.reshape(bt, sq, d).astype(o_ref.dtype)


# ---------------------------------------------------------------------------
# Wrapper
# ---------------------------------------------------------------------------
def _pick_batch_tile(b, sq, max_rows=512):
    """Largest divisor of b so the folded M dimension (b_tile*sq) stays VMEM-friendly.

    Folding batches into M raises MXU row fill (128-row MXU on v5e, 256 on v6e/v7x) and
    amortizes per-grid-step overhead; the cap keeps activation slabs small and, for large
    batches, leaves >=2 parallel grid steps so both v7x TensorCores get work.
    """
    best = 1
    for t in range(1, b + 1):
        if b % t == 0 and t * sq <= max(max_rows, sq):
            best = t
    return best


def multimodal_fusion_attention(kparams, x, y, n_head, *, b_tile=None):
    b, sq, d = x.shape
    sk = y.shape[1]
    assert d % n_head == 0
    if b_tile is None:
        b_tile = _pick_batch_tile(b, sq)
    assert b % b_tile == 0

    def rep(arr):  # replicated (grid-invariant) full-array block: DMA'd once, VMEM resident
        nd = arr.ndim
        return pl.BlockSpec(arr.shape, lambda i, _nd=nd: (0,) * _nd)

    weights = (kparams["wq"], kparams["bq"], kparams["wkv"], kparams["bkv"],
               kparams["wo"], kparams["bo"], kparams["w_h"], kparams["b_h"],
               kparams["gamma_h"], kparams["beta_h"], kparams["w_out"], kparams["b_out"])

    # Scoped-VMEM budget from the real footprint (double-buffered activations + resident
    # weights + headroom), capped at v7x's 64 MiB physical VMEM.
    weight_bytes = sum(int(w.size) * w.dtype.itemsize for w in weights)
    act_bytes = 4 * (b_tile * sq * d * 2 + b_tile * sk * d)  # f32 x/out slabs + y slab
    vmem_limit = int(min(64 << 20, max(32 << 20, 4 * (weight_bytes + 2 * act_bytes))))

    return pl.pallas_call(
        functools.partial(_fusion_attention_kernel, n_head=n_head),
        out_shape=jax.ShapeDtypeStruct((b, sq, d), jnp.float32),
        grid=(b // b_tile,),
        in_specs=[pl.BlockSpec((b_tile, sq, d), lambda i: (i, 0, 0)),
                  pl.BlockSpec((b_tile, sk, d), lambda i: (i, 0, 0))]
                 + [rep(w) for w in weights],
        out_specs=pl.BlockSpec((b_tile, sq, d), lambda i: (i, 0, 0)),
        compiler_params=pltpu.CompilerParams(
            dimension_semantics=("parallel",),
            vmem_limit_bytes=vmem_limit),
    )(x, y, *weights)


# ---------------------------------------------------------------------------
# Deterministic parameter init (PyTorch nn.Linear-style uniform), f32 "module" params
# ---------------------------------------------------------------------------
def _uniform_linear(key, din, dout):
    kw, kb = jax.random.split(key)
    lim = 1.0 / math.sqrt(din)
    w = jax.random.uniform(kw, (din, dout), jnp.float32, -lim, lim)
    b = jax.random.uniform(kb, (1, dout), jnp.float32, -lim, lim)
    return w, b


def init_multimodal_fusion_attention(key, d_model, num_fusion_layer=4):
    d2 = 2 * d_model
    kq, kk, kv, ko, kh, kout = jax.random.split(key, 6)

    wq, bq = _uniform_linear(kq, d_model, d_model)
    wk, bk = _uniform_linear(kk, d_model, d_model)
    wv, bv = _uniform_linear(kv, d_model, d_model)
    wo, bo = _uniform_linear(ko, d_model, d_model)

    hidden_keys = jax.random.split(kh, num_fusion_layer)
    w_h, b_h = [], []
    for hk in hidden_keys:
        w, bb = _uniform_linear(hk, d2, d2)
        w_h.append(w)
        b_h.append(bb)
    w_out, b_out = _uniform_linear(kout, d2, d_model)

    return {
        "wq": wq, "bq": bq, "wk": wk, "bk": bk, "wv": wv, "bv": bv,
        "wo": wo, "bo": bo,
        "w_h": jnp.stack(w_h),                          # [L, 2D, 2D]
        "b_h": jnp.stack(b_h),                          # [L, 1, 2D]
        "gamma_h": jnp.ones((num_fusion_layer, 1, d2), jnp.float32),
        "beta_h": jnp.zeros((num_fusion_layer, 1, d2), jnp.float32),
        "w_out": w_out, "b_out": b_out,                 # [2D, D], [1, D]
    }


def prepare_kernel_params(params, n_head):
    """One-time (init-time) transform of module params into kernel operands:
       K|V fused, 1/sqrt(dh) folded into Wq/bq, matmul weights cast to bf16 (MXU-native)."""
    d = params["wq"].shape[0]
    dh = d // n_head
    scale = 1.0 / math.sqrt(dh)
    bf16 = jnp.bfloat16
    return {
        "wq": (params["wq"] * scale).astype(bf16),
        "bq": params["bq"] * scale,                                      # f32
        "wkv": jnp.concatenate([params["wk"], params["wv"]], axis=1).astype(bf16),  # [D, 2D]
        "bkv": jnp.concatenate([params["bk"], params["bv"]], axis=1),    # [1, 2D] f32
        "wo": params["wo"].astype(bf16), "bo": params["bo"],
        "w_h": params["w_h"].astype(bf16), "b_h": params["b_h"],
        "gamma_h": params["gamma_h"], "beta_h": params["beta_h"],
        "w_out": params["w_out"].astype(bf16), "b_out": params["b_out"],
    }


# ---------------------------------------------------------------------------
# Pure-JAX f32 reference (original module math, exact softmax) for a sanity check
# ---------------------------------------------------------------------------
def reference_forward(params, x, y, n_head):
    b, sq, d = x.shape
    sk = y.shape[1]
    dh = d // n_head
    q = x @ params["wq"] + params["bq"]
    k = y @ params["wk"] + params["bk"]
    v = y @ params["wv"] + params["bv"]
    qh = q.reshape(b, sq, n_head, dh).transpose(0, 2, 1, 3)
    kh = k.reshape(b, sk, n_head, dh).transpose(0, 2, 1, 3)
    vh = v.reshape(b, sk, n_head, dh).transpose(0, 2, 1, 3)
    s = jnp.einsum("bhqd,bhkd->bhqk", qh, kh) / math.sqrt(dh)
    p = jax.nn.softmax(s, axis=-1)
    o = jnp.einsum("bhqk,bhkd->bhqd", p, vh).transpose(0, 2, 1, 3).reshape(b, sq, d)
    y_att = o @ params["wo"] + params["bo"]

    h = jnp.concatenate([x, y_att], axis=-1)
    for l in range(params["w_h"].shape[0]):
        h = h @ params["w_h"][l] + params["b_h"][l]
        mu = h.mean(-1, keepdims=True)
        var = ((h - mu) ** 2).mean(-1, keepdims=True)
        h = (h - mu) / jnp.sqrt(var + 1e-5)
        h = h * params["gamma_h"][l] + params["beta_h"][l]
        h = jnp.where(h > 0, h, 0.01 * h)
    return h @ params["w_out"] + params["b_out"]


# ---------------------------------------------------------------------------
if __name__ == "__main__":
    d_model, n_head = 32, 4
    batch, seq1, seq2 = 2, 8, 16     # seq lengths kept multiples of 8 (sublane-aligned reshapes)

    key = jax.random.PRNGKey(0)
    kx, ky, kp = jax.random.split(key, 3)
    x = jax.random.normal(kx, (batch, seq1, d_model), jnp.float32)
    y = jax.random.normal(ky, (batch, seq2, d_model), jnp.float32)

    params = init_multimodal_fusion_attention(kp, d_model, num_fusion_layer=4)
    kparams = prepare_kernel_params(params, n_head)

    out = multimodal_fusion_attention(kparams, x, y, n_head)
    jax.block_until_ready(out)
    assert out.shape == (batch, seq1, d_model)

    # Kernel uses bf16 MXU operands (f32 accumulation) + approx-reciprocal softmax, so compare
    # against the f32 reference with a tolerance that covers bf16 operand rounding.
    ref = reference_forward(params, x, y, n_head)
    err = float(jnp.max(jnp.abs(out - ref)))
    assert err < 1e-1, f"max abs err vs reference: {err}"
    print("KERNEL_OK")
</pallas_src>

<mosaic_0001>
module attributes {stable_mosaic.version = 11 : i64} {
  func.func @_fusion_attention_kernel(%arg0: i32, %arg1: memref<2x8x32xf32, #tpu.memory_space<vmem>>, %arg2: memref<2x16x32xf32, #tpu.memory_space<vmem>>, %arg3: memref<32x32xbf16, #tpu.memory_space<vmem>>, %arg4: memref<1x32xf32, #tpu.memory_space<vmem>>, %arg5: memref<32x64xbf16, #tpu.memory_space<vmem>>, %arg6: memref<1x64xf32, #tpu.memory_space<vmem>>, %arg7: memref<32x32xbf16, #tpu.memory_space<vmem>>, %arg8: memref<1x32xf32, #tpu.memory_space<vmem>>, %arg9: memref<4x64x64xbf16, #tpu.memory_space<vmem>>, %arg10: memref<4x1x64xf32, #tpu.memory_space<vmem>>, %arg11: memref<4x1x64xf32, #tpu.memory_space<vmem>>, %arg12: memref<4x1x64xf32, #tpu.memory_space<vmem>>, %arg13: memref<64x32xbf16, #tpu.memory_space<vmem>>, %arg14: memref<1x32xf32, #tpu.memory_space<vmem>>, %arg15: memref<2x8x32xf32, #tpu.memory_space<vmem>>) attributes {dimension_semantics = [#tpu.dimension_semantics<parallel>], iteration_bounds = array<i64: 1>, scalar_prefetch = 0 : i64, scratch_operands = 0 : i64, tpu.core_type = #tpu.core_type<tc>, window_params = [{transform_indices = @transform_0, window_bounds = array<i64: 2, 8, 32>}, {transform_indices = @transform_1, window_bounds = array<i64: 2, 16, 32>}, {pipeline_mode = #tpu.pipeline_mode<synchronous>, transform_indices = @transform_2, window_bounds = array<i64: 32, 32>}, {pipeline_mode = #tpu.pipeline_mode<synchronous>, transform_indices = @transform_3, window_bounds = array<i64: 1, 32>}, {pipeline_mode = #tpu.pipeline_mode<synchronous>, transform_indices = @transform_4, window_bounds = array<i64: 32, 64>}, {pipeline_mode = #tpu.pipeline_mode<synchronous>, transform_indices = @transform_5, window_bounds = array<i64: 1, 64>}, {pipeline_mode = #tpu.pipeline_mode<synchronous>, transform_indices = @transform_6, window_bounds = array<i64: 32, 32>}, {pipeline_mode = #tpu.pipeline_mode<synchronous>, transform_indices = @transform_7, window_bounds = array<i64: 1, 32>}, {pipeline_mode = #tpu.pipeline_mode<synchronous>, transform_indices = @transform_8, window_bounds = array<i64: 4, 64, 64>}, {pipeline_mode = #tpu.pipeline_mode<synchronous>, transform_indices = @transform_9, window_bounds = array<i64: 4, 1, 64>}, {pipeline_mode = #tpu.pipeline_mode<synchronous>, transform_indices = @transform_10, window_bounds = array<i64: 4, 1, 64>}, {pipeline_mode = #tpu.pipeline_mode<synchronous>, transform_indices = @transform_11, window_bounds = array<i64: 4, 1, 64>}, {pipeline_mode = #tpu.pipeline_mode<synchronous>, transform_indices = @transform_12, window_bounds = array<i64: 64, 32>}, {pipeline_mode = #tpu.pipeline_mode<synchronous>, transform_indices = @transform_13, window_bounds = array<i64: 1, 32>}, {transform_indices = @transform_14, window_bounds = array<i64: 2, 8, 32>}]} {
    %c0 = arith.constant 0 : index
    %c0_0 = arith.constant 0 : index
    %c0_1 = arith.constant 0 : index
    %0 = vector.load %arg1[%c0, %c0_0, %c0_1] : memref<2x8x32xf32, #tpu.memory_space<vmem>>, vector<2x8x32xf32>
    %1 = vector.shape_cast %0 : vector<2x8x32xf32> to vector<16x32xf32>
    %c0_2 = arith.constant 0 : index
    %c0_3 = arith.constant 0 : index
    %c0_4 = arith.constant 0 : index
    %2 = vector.load %arg2[%c0_2, %c0_3, %c0_4] : memref<2x16x32xf32, #tpu.memory_space<vmem>>, vector<2x16x32xf32>
    %3 = vector.shape_cast %2 : vector<2x16x32xf32> to vector<32x32xf32>
    %4 = arith.truncf %1 : vector<16x32xf32> to vector<16x32xbf16>
    %c0_5 = arith.constant 0 : index
    %c0_6 = arith.constant 0 : index
    %5 = vector.load %arg3[%c0_5, %c0_6] : memref<32x32xbf16, #tpu.memory_space<vmem>>, vector<32x32xbf16>
    %cst = arith.constant dense<0.000000e+00> : vector<16x32xf32>
    %6 = tpu.matmul %4, %5, %cst {dimension_numbers = #tpu.dot_dimension_numbers<[1], [0], [0], [1], [0, 0, 1, 1], [], []>} : vector<16x32xbf16>, vector<32x32xbf16>, vector<16x32xf32> -> vector<16x32xf32>
    %c0_7 = arith.constant 0 : index
    %c0_8 = arith.constant 0 : index
    %7 = vector.load %arg4[%c0_7, %c0_8] : memref<1x32xf32, #tpu.memory_space<vmem>>, vector<1x32xf32>
    %8 = vector.broadcast %7 : vector<1x32xf32> to vector<16x32xf32>
    %9 = arith.addf %6, %8 : vector<16x32xf32>
    %10 = arith.truncf %3 : vector<32x32xf32> to vector<32x32xbf16>
    %c0_9 = arith.constant 0 : index
    %c0_10 = arith.constant 0 : index
    %11 = vector.load %arg5[%c0_9, %c0_10] : memref<32x64xbf16, #tpu.memory_space<vmem>>, vector<32x64xbf16>
    %cst_11 = arith.constant dense<0.000000e+00> : vector<32x64xf32>
    %12 = tpu.matmul %10, %11, %cst_11 {dimension_numbers = #tpu.dot_dimension_numbers<[1], [0], [0], [1], [0, 0, 1, 1], [], []>} : vector<32x32xbf16>, vector<32x64xbf16>, vector<32x64xf32> -> vector<32x64xf32>
    %c0_12 = arith.constant 0 : index
    %c0_13 = arith.constant 0 : index
    %13 = vector.load %arg6[%c0_12, %c0_13] : memref<1x64xf32, #tpu.memory_space<vmem>>, vector<1x64xf32>
    %14 = vector.broadcast %13 : vector<1x64xf32> to vector<32x64xf32>
    %15 = arith.addf %12, %14 : vector<32x64xf32>
    %16 = vector.shape_cast %9 : vector<16x32xf32> to vector<2x8x32xf32>
    %17 = arith.truncf %16 : vector<2x8x32xf32> to vector<2x8x32xbf16>
    %18 = vector.extract_strided_slice %15 {offsets = [0, 0], sizes = [32, 32], strides = [1, 1]} : vector<32x64xf32> to vector<32x32xf32>
    %19 = vector.shape_cast %18 : vector<32x32xf32> to vector<2x16x32xf32>
    %20 = arith.truncf %19 : vector<2x16x32xf32> to vector<2x16x32xbf16>
    %21 = vector.extract_strided_slice %15 {offsets = [0, 32], sizes = [32, 32], strides = [1, 1]} : vector<32x64xf32> to vector<32x32xf32>
    %22 = vector.shape_cast %21 : vector<32x32xf32> to vector<2x16x32xf32>
    %23 = arith.truncf %22 : vector<2x16x32xf32> to vector<2x16x32xbf16>
    %24 = vector.extract_strided_slice %17 {offsets = [0, 0, 0], sizes = [2, 8, 8], strides = [1, 1, 1]} : vector<2x8x32xbf16> to vector<2x8x8xbf16>
    %25 = vector.extract_strided_slice %20 {offsets = [0, 0, 0], sizes = [2, 16, 8], strides = [1, 1, 1]} : vector<2x16x32xbf16> to vector<2x16x8xbf16>
    %26 = vector.extract_strided_slice %23 {offsets = [0, 0, 0], sizes = [2, 16, 8], strides = [1, 1, 1]} : vector<2x16x32xbf16> to vector<2x16x8xbf16>
    "tpu.trace_start"() <{level = 10 : i32, message = "bqd,bkd->bqk"}> : () -> ()
    %cst_14 = arith.constant dense<0.000000e+00> : vector<2x8x16xf32>
    %27 = tpu.matmul %24, %25, %cst_14 {dimension_numbers = #tpu.dot_dimension_numbers<[2], [2], [1], [1], [0, 0, 0, 1, 1, 1], [0], [0]>} : vector<2x8x8xbf16>, vector<2x16x8xbf16>, vector<2x8x16xf32> -> vector<2x8x16xf32>
    "tpu.trace_stop"() : () -> ()
    %cst_15 = arith.constant dense<0xFF800000> : vector<2x8xf32>
    %28 = vector.multi_reduction <maximumf>, %27, %cst_15 [2] : vector<2x8x16xf32> to vector<2x8xf32>
    %29 = vector.shape_cast %28 : vector<2x8xf32> to vector<2x8x1xf32>
    %30 = vector.broadcast %29 : vector<2x8x1xf32> to vector<2x8x16xf32>
    %31 = arith.subf %27, %30 : vector<2x8x16xf32>
    %32 = math.exp %31 : vector<2x8x16xf32>
    %cst_16 = arith.constant dense<0.000000e+00> : vector<2x8xf32>
    %33 = vector.multi_reduction <add>, %32, %cst_16 [2] : vector<2x8x16xf32> to vector<2x8xf32>
    %34 = vector.shape_cast %33 : vector<2x8xf32> to vector<2x8x1xf32>
    %35 = tpu.reciprocal %34 {approx = true} : vector<2x8x1xf32> -> vector<2x8x1xf32>
    %36 = vector.broadcast %35 : vector<2x8x1xf32> to vector<2x8x16xf32>
    %37 = arith.mulf %32, %36 : vector<2x8x16xf32>
    %38 = arith.truncf %37 : vector<2x8x16xf32> to vector<2x8x16xbf16>
    "tpu.trace_start"() <{level = 10 : i32, message = "bqk,bkd->bqd"}> : () -> ()
    %cst_17 = arith.constant dense<0.000000e+00> : vector<2x8x8xf32>
    %39 = tpu.matmul %38, %26, %cst_17 {dimension_numbers = #tpu.dot_dimension_numbers<[2], [1], [1], [2], [0, 0, 0, 1, 1, 2], [0], [0]>} : vector<2x8x16xbf16>, vector<2x16x8xbf16>, vector<2x8x8xf32> -> vector<2x8x8xf32>
    "tpu.trace_stop"() : () -> ()
    %40 = vector.extract_strided_slice %17 {offsets = [0, 0, 8], sizes = [2, 8, 8], strides = [1, 1, 1]} : vector<2x8x32xbf16> to vector<2x8x8xbf16>
    %41 = vector.extract_strided_slice %20 {offsets = [0, 0, 8], sizes = [2, 16, 8], strides = [1, 1, 1]} : vector<2x16x32xbf16> to vector<2x16x8xbf16>
    %42 = vector.extract_strided_slice %23 {offsets = [0, 0, 8], sizes = [2, 16, 8], strides = [1, 1, 1]} : vector<2x16x32xbf16> to vector<2x16x8xbf16>
    "tpu.trace_start"() <{level = 10 : i32, message = "bqd,bkd->bqk"}> : () -> ()
    %cst_18 = arith.constant dense<0.000000e+00> : vector<2x8x16xf32>
    %43 = tpu.matmul %40, %41, %cst_18 {dimension_numbers = #tpu.dot_dimension_numbers<[2], [2], [1], [1], [0, 0, 0, 1, 1, 1], [0], [0]>} : vector<2x8x8xbf16>, vector<2x16x8xbf16>, vector<2x8x16xf32> -> vector<2x8x16xf32>
    "tpu.trace_stop"() : () -> ()
    %cst_19 = arith.constant dense<0xFF800000> : vector<2x8xf32>
    %44 = vector.multi_reduction <maximumf>, %43, %cst_19 [2] : vector<2x8x16xf32> to vector<2x8xf32>
    %45 = vector.shape_cast %44 : vector<2x8xf32> to vector<2x8x1xf32>
    %46 = vector.broadcast %45 : vector<2x8x1xf32> to vector<2x8x16xf32>
    %47 = arith.subf %43, %46 : vector<2x8x16xf32>
    %48 = math.exp %47 : vector<2x8x16xf32>
    %cst_20 = arith.constant dense<0.000000e+00> : vector<2x8xf32>
    %49 = vector.multi_reduction <add>, %48, %cst_20 [2] : vector<2x8x16xf32> to vector<2x8xf32>
    %50 = vector.shape_cast %49 : vector<2x8xf32> to vector<2x8x1xf32>
    %51 = tpu.reciprocal %50 {approx = true} : vector<2x8x1xf32> -> vector<2x8x1xf32>
    %52 = vector.broadcast %51 : vector<2x8x1xf32> to vector<2x8x16xf32>
    %53 = arith.mulf %48, %52 : vector<2x8x16xf32>
    %54 = arith.truncf %53 : vector<2x8x16xf32> to vector<2x8x16xbf16>
    "tpu.trace_start"() <{level = 10 : i32, message = "bqk,bkd->bqd"}> : () -> ()
    %cst_21 = arith.constant dense<0.000000e+00> : vector<2x8x8xf32>
    %55 = tpu.matmul %54, %42, %cst_21 {dimension_numbers = #tpu.dot_dimension_numbers<[2], [1], [1], [2], [0, 0, 0, 1, 1, 2], [0], [0]>} : vector<2x8x16xbf16>, vector<2x16x8xbf16>, vector<2x8x8xf32> -> vector<2x8x8xf32>
    "tpu.trace_stop"() : () -> ()
    %56 = vector.extract_strided_slice %17 {offsets = [0, 0, 16], sizes = [2, 8, 8], strides = [1, 1, 1]} : vector<2x8x32xbf16> to vector<2x8x8xbf16>
    %57 = vector.extract_strided_slice %20 {offsets = [0, 0, 16], sizes = [2, 16, 8], strides = [1, 1, 1]} : vector<2x16x32xbf16> to vector<2x16x8xbf16>
    %58 = vector.extract_strided_slice %23 {offsets = [0, 0, 16], sizes = [2, 16, 8], strides = [1, 1, 1]} : vector<2x16x32xbf16> to vector<2x16x8xbf16>
    "tpu.trace_start"() <{level = 10 : i32, message = "bqd,bkd->bqk"}> : () -> ()
    %cst_22 = arith.constant dense<0.000000e+00> : vector<2x8x16xf32>
    %59 = tpu.matmul %56, %57, %cst_22 {dimension_numbers = #tpu.dot_dimension_numbers<[2], [2], [1], [1], [0, 0, 0, 1, 1, 1], [0], [0]>} : vector<2x8x8xbf16>, vector<2x16x8xbf16>, vector<2x8x16xf32> -> vector<2x8x16xf32>
    "tpu.trace_stop"() : () -> ()
    %cst_23 = arith.constant dense<0xFF800000> : vector<2x8xf32>
    %60 = vector.multi_reduction <maximumf>, %59, %cst_23 [2] : vector<2x8x16xf32> to vector<2x8xf32>
    %61 = vector.shape_cast %60 : vector<2x8xf32> to vector<2x8x1xf32>
    %62 = vector.broadcast %61 : vector<2x8x1xf32> to vector<2x8x16xf32>
    %63 = arith.subf %59, %62 : vector<2x8x16xf32>
    %64 = math.exp %63 : vector<2x8x16xf32>
    %cst_24 = arith.constant dense<0.000000e+00> : vector<2x8xf32>
    %65 = vector.multi_reduction <add>, %64, %cst_24 [2] : vector<2x8x16xf32> to vector<2x8xf32>
    %66 = vector.shape_cast %65 : vector<2x8xf32> to vector<2x8x1xf32>
    %67 = tpu.reciprocal %66 {approx = true} : vector<2x8x1xf32> -> vector<2x8x1xf32>
    %68 = vector.broadcast %67 : vector<2x8x1xf32> to vector<2x8x16xf32>
    %69 = arith.mulf %64, %68 : vector<2x8x16xf32>
    %70 = arith.truncf %69 : vector<2x8x16xf32> to vector<2x8x16xbf16>
    "tpu.trace_start"() <{level = 10 : i32, message = "bqk,bkd->bqd"}> : () -> ()
    %cst_25 = arith.constant dense<0.000000e+00> : vector<2x8x8xf32>
    %71 = tpu.matmul %70, %58, %cst_25 {dimension_numbers = #tpu.dot_dimension_numbers<[2], [1], [1], [2], [0, 0, 0, 1, 1, 2], [0], [0]>} : vector<2x8x16xbf16>, vector<2x16x8xbf16>, vector<2x8x8xf32> -> vector<2x8x8xf32>
    "tpu.trace_stop"() : () -> ()
    %72 = vector.extract_strided_slice %17 {offsets = [0, 0, 24], sizes = [2, 8, 8], strides = [1, 1, 1]} : vector<2x8x32xbf16> to vector<2x8x8xbf16>
    %73 = vector.extract_strided_slice %20 {offsets = [0, 0, 24], sizes = [2, 16, 8], strides = [1, 1, 1]} : vector<2x16x32xbf16> to vector<2x16x8xbf16>
    %74 = vector.extract_strided_slice %23 {offsets = [0, 0, 24], sizes = [2, 16, 8], strides = [1, 1, 1]} : vector<2x16x32xbf16> to vector<2x16x8xbf16>
    "tpu.trace_start"() <{level = 10 : i32, message = "bqd,bkd->bqk"}> : () -> ()
    %cst_26 = arith.constant dense<0.000000e+00> : vector<2x8x16xf32>
    %75 = tpu.matmul %72, %73, %cst_26 {dimension_numbers = #tpu.dot_dimension_numbers<[2], [2], [1], [1], [0, 0, 0, 1, 1, 1], [0], [0]>} : vector<2x8x8xbf16>, vector<2x16x8xbf16>, vector<2x8x16xf32> -> vector<2x8x16xf32>
    "tpu.trace_stop"() : () -> ()
    %cst_27 = arith.constant dense<0xFF800000> : vector<2x8xf32>
    %76 = vector.multi_reduction <maximumf>, %75, %cst_27 [2] : vector<2x8x16xf32> to vector<2x8xf32>
    %77 = vector.shape_cast %76 : vector<2x8xf32> to vector<2x8x1xf32>
    %78 = vector.broadcast %77 : vector<2x8x1xf32> to vector<2x8x16xf32>
    %79 = arith.subf %75, %78 : vector<2x8x16xf32>
    %80 = math.exp %79 : vector<2x8x16xf32>
    %cst_28 = arith.constant dense<0.000000e+00> : vector<2x8xf32>
    %81 = vector.multi_reduction <add>, %80, %cst_28 [2] : vector<2x8x16xf32> to vector<2x8xf32>
    %82 = vector.shape_cast %81 : vector<2x8xf32> to vector<2x8x1xf32>
    %83 = tpu.reciprocal %82 {approx = true} : vector<2x8x1xf32> -> vector<2x8x1xf32>
    %84 = vector.broadcast %83 : vector<2x8x1xf32> to vector<2x8x16xf32>
    %85 = arith.mulf %80, %84 : vector<2x8x16xf32>
    %86 = arith.truncf %85 : vector<2x8x16xf32> to vector<2x8x16xbf16>
    "tpu.trace_start"() <{level = 10 : i32, message = "bqk,bkd->bqd"}> : () -> ()
    %cst_29 = arith.constant dense<0.000000e+00> : vector<2x8x8xf32>
    %87 = tpu.matmul %86, %74, %cst_29 {dimension_numbers = #tpu.dot_dimension_numbers<[2], [1], [1], [2], [0, 0, 0, 1, 1, 2], [0], [0]>} : vector<2x8x16xbf16>, vector<2x16x8xbf16>, vector<2x8x8xf32> -> vector<2x8x8xf32>
    "tpu.trace_stop"() : () -> ()
    %88 = tpu.concatenate %39, %55, %71, %87 in 2 : vector<2x8x8xf32>, vector<2x8x8xf32>, vector<2x8x8xf32>, vector<2x8x8xf32> -> vector<2x8x32xf32>
    %89 = vector.shape_cast %88 : vector<2x8x32xf32> to vector<16x32xf32>
    %90 = arith.truncf %89 : vector<16x32xf32> to vector<16x32xbf16>
    %c0_30 = arith.constant 0 : index
    %c0_31 = arith.constant 0 : index
    %91 = vector.load %arg7[%c0_30, %c0_31] : memref<32x32xbf16, #tpu.memory_space<vmem>>, vector<32x32xbf16>
    %cst_32 = arith.constant dense<0.000000e+00> : vector<16x32xf32>
    %92 = tpu.matmul %90, %91, %cst_32 {dimension_numbers = #tpu.dot_dimension_numbers<[1], [0], [0], [1], [0, 0, 1, 1], [], []>} : vector<16x32xbf16>, vector<32x32xbf16>, vector<16x32xf32> -> vector<16x32xf32>
    %c0_33 = arith.constant 0 : index
    %c0_34 = arith.constant 0 : index
    %93 = vector.load %arg8[%c0_33, %c0_34] : memref<1x32xf32, #tpu.memory_space<vmem>>, vector<1x32xf32>
    %94 = vector.broadcast %93 : vector<1x32xf32> to vector<16x32xf32>
    %95 = arith.addf %92, %94 : vector<16x32xf32>
    %c0_35 = arith.constant 0 : index
    %c0_36 = arith.constant 0 : index
    %c0_37 = arith.constant 0 : index
    %96 = vector.load %arg9[%c0_35, %c0_36, %c0_37] : memref<4x64x64xbf16, #tpu.memory_space<vmem>>, vector<1x64x64xbf16>
    %97 = vector.shape_cast %96 : vector<1x64x64xbf16> to vector<64x64xbf16>
    %98 = arith.truncf %1 : vector<16x32xf32> to vector<16x32xbf16>
    %99 = vector.extract_strided_slice %97 {offsets = [0, 0], sizes = [32, 64], strides = [1, 1]} : vector<64x64xbf16> to vector<32x64xbf16>
    %cst_38 = arith.constant dense<0.000000e+00> : vector<16x64xf32>
    %100 = tpu.matmul %98, %99, %cst_38 {dimension_numbers = #tpu.dot_dimension_numbers<[1], [0], [0], [1], [0, 0, 1, 1], [], []>} : vector<16x32xbf16>, vector<32x64xbf16>, vector<16x64xf32> -> vector<16x64xf32>
    %101 = arith.truncf %95 : vector<16x32xf32> to vector<16x32xbf16>
    %102 = vector.extract_strided_slice %97 {offsets = [32, 0], sizes = [32, 64], strides = [1, 1]} : vector<64x64xbf16> to vector<32x64xbf16>
    %cst_39 = arith.constant dense<0.000000e+00> : vector<16x64xf32>
    %103 = tpu.matmul %101, %102, %cst_39 {dimension_numbers = #tpu.dot_dimension_numbers<[1], [0], [0], [1], [0, 0, 1, 1], [], []>} : vector<16x32xbf16>, vector<32x64xbf16>, vector<16x64xf32> -> vector<16x64xf32>
    %104 = arith.addf %100, %103 : vector<16x64xf32>
    %c0_40 = arith.constant 0 : index
    %c0_41 = arith.constant 0 : index
    %c0_42 = arith.constant 0 : index
    %105 = vector.load %arg10[%c0_40, %c0_41, %c0_42] : memref<4x1x64xf32, #tpu.memory_space<vmem>>, vector<1x1x64xf32>
    %106 = vector.shape_cast %105 : vector<1x1x64xf32> to vector<1x64xf32>
    %107 = vector.broadcast %106 : vector<1x64xf32> to vector<16x64xf32>
    %108 = arith.addf %104, %107 : vector<16x64xf32>
    %c0_43 = arith.constant 0 : index
    %c0_44 = arith.constant 0 : index
    %c0_45 = arith.constant 0 : index
    %109 = vector.load %arg11[%c0_43, %c0_44, %c0_45] : memref<4x1x64xf32, #tpu.memory_space<vmem>>, vector<1x1x64xf32>
    %110 = vector.shape_cast %109 : vector<1x1x64xf32> to vector<1x64xf32>
    %c0_46 = arith.constant 0 : index
    %c0_47 = arith.constant 0 : index
    %c0_48 = arith.constant 0 : index
    %111 = vector.load %arg12[%c0_46, %c0_47, %c0_48] : memref<4x1x64xf32, #tpu.memory_space<vmem>>, vector<1x1x64xf32>
    %112 = vector.shape_cast %111 : vector<1x1x64xf32> to vector<1x64xf32>
    %cst_49 = arith.constant dense<0.000000e+00> : vector<16xf32>
    %113 = vector.multi_reduction <add>, %108, %cst_49 [1] : vector<16x64xf32> to vector<16xf32>
    %114 = vector.shape_cast %113 : vector<16xf32> to vector<16x1xf32>
    %cst_50 = arith.constant 6.400000e+01 : f32
    %115 = vector.broadcast %cst_50 : f32 to vector<16x1xf32>
    %116 = arith.divf %114, %115 : vector<16x1xf32>
    %117 = vector.broadcast %116 : vector<16x1xf32> to vector<16x64xf32>
    %118 = arith.subf %108, %117 : vector<16x64xf32>
    %119 = vector.broadcast %116 : vector<16x1xf32> to vector<16x64xf32>
    %120 = arith.subf %108, %119 : vector<16x64xf32>
    %121 = arith.mulf %118, %120 : vector<16x64xf32>
    %cst_51 = arith.constant dense<0.000000e+00> : vector<16xf32>
    %122 = vector.multi_reduction <add>, %121, %cst_51 [1] : vector<16x64xf32> to vector<16xf32>
    %123 = vector.shape_cast %122 : vector<16xf32> to vector<16x1xf32>
    %cst_52 = arith.constant 6.400000e+01 : f32
    %124 = vector.broadcast %cst_52 : f32 to vector<16x1xf32>
    %125 = arith.divf %123, %124 : vector<16x1xf32>
    %126 = vector.broadcast %116 : vector<16x1xf32> to vector<16x64xf32>
    %127 = arith.subf %108, %126 : vector<16x64xf32>
    %cst_53 = arith.constant 9.99999974E-6 : f32
    %128 = vector.broadcast %cst_53 : f32 to vector<16x1xf32>
    %129 = arith.addf %125, %128 : vector<16x1xf32>
    %130 = math.rsqrt %129 : vector<16x1xf32>
    %131 = vector.broadcast %130 : vector<16x1xf32> to vector<16x64xf32>
    %132 = arith.mulf %127, %131 : vector<16x64xf32>
    %133 = vector.broadcast %110 : vector<1x64xf32> to vector<16x64xf32>
    %134 = arith.mulf %132, %133 : vector<16x64xf32>
    %135 = vector.broadcast %112 : vector<1x64xf32> to vector<16x64xf32>
    %136 = arith.addf %134, %135 : vector<16x64xf32>
    %cst_54 = arith.constant 0.000000e+00 : f32
    %137 = vector.broadcast %cst_54 : f32 to vector<16x64xf32>
    %138 = arith.cmpf ogt, %136, %137 : vector<16x64xf32>
    %cst_55 = arith.constant 0.00999999977 : f32
    %139 = vector.broadcast %cst_55 : f32 to vector<16x64xf32>
    %140 = arith.mulf %139, %136 : vector<16x64xf32>
    %141 = arith.select %138, %136, %140 : vector<16x64xi1>, vector<16x64xf32>
    %142 = arith.truncf %141 : vector<16x64xf32> to vector<16x64xbf16>
    %c1 = arith.constant 1 : index
    %c0_56 = arith.constant 0 : index
    %c0_57 = arith.constant 0 : index
    %143 = vector.load %arg9[%c1, %c0_56, %c0_57] : memref<4x64x64xbf16, #tpu.memory_space<vmem>>, vector<1x64x64xbf16>
    %144 = vector.shape_cast %143 : vector<1x64x64xbf16> to vector<64x64xbf16>
    %cst_58 = arith.constant dense<0.000000e+00> : vector<16x64xf32>
    %145 = tpu.matmul %142, %144, %cst_58 {dimension_numbers = #tpu.dot_dimension_numbers<[1], [0], [0], [1], [0, 0, 1, 1], [], []>} : vector<16x64xbf16>, vector<64x64xbf16>, vector<16x64xf32> -> vector<16x64xf32>
    %c1_59 = arith.constant 1 : index
    %c0_60 = arith.constant 0 : index
    %c0_61 = arith.constant 0 : index
    %146 = vector.load %arg10[%c1_59, %c0_60, %c0_61] : memref<4x1x64xf32, #tpu.memory_space<vmem>>, vector<1x1x64xf32>
    %147 = vector.shape_cast %146 : vector<1x1x64xf32> to vector<1x64xf32>
    %148 = vector.broadcast %147 : vector<1x64xf32> to vector<16x64xf32>
    %149 = arith.addf %145, %148 : vector<16x64xf32>
    %c1_62 = arith.constant 1 : index
    %c0_63 = arith.constant 0 : index
    %c0_64 = arith.constant 0 : index
    %150 = vector.load %arg11[%c1_62, %c0_63, %c0_64] : memref<4x1x64xf32, #tpu.memory_space<vmem>>, vector<1x1x64xf32>
    %151 = vector.shape_cast %150 : vector<1x1x64xf32> to vector<1x64xf32>
    %c1_65 = arith.constant 1 : index
    %c0_66 = arith.constant 0 : index
    %c0_67 = arith.constant 0 : index
    %152 = vector.load %arg12[%c1_65, %c0_66, %c0_67] : memref<4x1x64xf32, #tpu.memory_space<vmem>>, vector<1x1x64xf32>
    %153 = vector.shape_cast %152 : vector<1x1x64xf32> to vector<1x64xf32>
    %cst_68 = arith.constant dense<0.000000e+00> : vector<16xf32>
    %154 = vector.multi_reduction <add>, %149, %cst_68 [1] : vector<16x64xf32> to vector<16xf32>
    %155 = vector.shape_cast %154 : vector<16xf32> to vector<16x1xf32>
    %cst_69 = arith.constant 6.400000e+01 : f32
    %156 = vector.broadcast %cst_69 : f32 to vector<16x1xf32>
    %157 = arith.divf %155, %156 : vector<16x1xf32>
    %158 = vector.broadcast %157 : vector<16x1xf32> to vector<16x64xf32>
    %159 = arith.subf %149, %158 : vector<16x64xf32>
    %160 = vector.broadcast %157 : vector<16x1xf32> to vector<16x64xf32>
    %161 = arith.subf %149, %160 : vector<16x64xf32>
    %162 = arith.mulf %159, %161 : vector<16x64xf32>
    %cst_70 = arith.constant dense<0.000000e+00> : vector<16xf32>
    %163 = vector.multi_reduction <add>, %162, %cst_70 [1] : vector<16x64xf32> to vector<16xf32>
    %164 = vector.shape_cast %163 : vector<16xf32> to vector<16x1xf32>
    %cst_71 = arith.constant 6.400000e+01 : f32
    %165 = vector.broadcast %cst_71 : f32 to vector<16x1xf32>
    %166 = arith.divf %164, %165 : vector<16x1xf32>
    %167 = vector.broadcast %157 : vector<16x1xf32> to vector<16x64xf32>
    %168 = arith.subf %149, %167 : vector<16x64xf32>
    %cst_72 = arith.constant 9.99999974E-6 : f32
    %169 = vector.broadcast %cst_72 : f32 to vector<16x1xf32>
    %170 = arith.addf %166, %169 : vector<16x1xf32>
    %171 = math.rsqrt %170 : vector<16x1xf32>
    %172 = vector.broadcast %171 : vector<16x1xf32> to vector<16x64xf32>
    %173 = arith.mulf %168, %172 : vector<16x64xf32>
    %174 = vector.broadcast %151 : vector<1x64xf32> to vector<16x64xf32>
    %175 = arith.mulf %173, %174 : vector<16x64xf32>
    %176 = vector.broadcast %153 : vector<1x64xf32> to vector<16x64xf32>
    %177 = arith.addf %175, %176 : vector<16x64xf32>
    %cst_73 = arith.constant 0.000000e+00 : f32
    %178 = vector.broadcast %cst_73 : f32 to vector<16x64xf32>
    %179 = arith.cmpf ogt, %177, %178 : vector<16x64xf32>
    %cst_74 = arith.constant 0.00999999977 : f32
    %180 = vector.broadcast %cst_74 : f32 to vector<16x64xf32>
    %181 = arith.mulf %180, %177 : vector<16x64xf32>
    %182 = arith.select %179, %177, %181 : vector<16x64xi1>, vector<16x64xf32>
    %183 = arith.truncf %182 : vector<16x64xf32> to vector<16x64xbf16>
    %c2 = arith.constant 2 : index
    %c0_75 = arith.constant 0 : index
    %c0_76 = arith.constant 0 : index
    %184 = vector.load %arg9[%c2, %c0_75, %c0_76] : memref<4x64x64xbf16, #tpu.memory_space<vmem>>, vector<1x64x64xbf16>
    %185 = vector.shape_cast %184 : vector<1x64x64xbf16> to vector<64x64xbf16>
    %cst_77 = arith.constant dense<0.000000e+00> : vector<16x64xf32>
    %186 = tpu.matmul %183, %185, %cst_77 {dimension_numbers = #tpu.dot_dimension_numbers<[1], [0], [0], [1], [0, 0, 1, 1], [], []>} : vector<16x64xbf16>, vector<64x64xbf16>, vector<16x64xf32> -> vector<16x64xf32>
    %c2_78 = arith.constant 2 : index
    %c0_79 = arith.constant 0 : index
    %c0_80 = arith.constant 0 : index
    %187 = vector.load %arg10[%c2_78, %c0_79, %c0_80] : memref<4x1x64xf32, #tpu.memory_space<vmem>>, vector<1x1x64xf32>
    %188 = vector.shape_cast %187 : vector<1x1x64xf32> to vector<1x64xf32>
    %189 = vector.broadcast %188 : vector<1x64xf32> to vector<16x64xf32>
    %190 = arith.addf %186, %189 : vector<16x64xf32>
    %c2_81 = arith.constant 2 : index
    %c0_82 = arith.constant 0 : index
    %c0_83 = arith.constant 0 : index
    %191 = vector.load %arg11[%c2_81, %c0_82, %c0_83] : memref<4x1x64xf32, #tpu.memory_space<vmem>>, vector<1x1x64xf32>
    %192 = vector.shape_cast %191 : vector<1x1x64xf32> to vector<1x64xf32>
    %c2_84 = arith.constant 2 : index
    %c0_85 = arith.constant 0 : index
    %c0_86 = arith.constant 0 : index
    %193 = vector.load %arg12[%c2_84, %c0_85, %c0_86] : memref<4x1x64xf32, #tpu.memory_space<vmem>>, vector<1x1x64xf32>
    %194 = vector.shape_cast %193 : vector<1x1x64xf32> to vector<1x64xf32>
    %cst_87 = arith.constant dense<0.000000e+00> : vector<16xf32>
    %195 = vector.multi_reduction <add>, %190, %cst_87 [1] : vector<16x64xf32> to vector<16xf32>
    %196 = vector.shape_cast %195 : vector<16xf32> to vector<16x1xf32>
    %cst_88 = arith.constant 6.400000e+01 : f32
    %197 = vector.broadcast %cst_88 : f32 to vector<16x1xf32>
    %198 = arith.divf %196, %197 : vector<16x1xf32>
    %199 = vector.broadcast %198 : vector<16x1xf32> to vector<16x64xf32>
    %200 = arith.subf %190, %199 : vector<16x64xf32>
    %201 = vector.broadcast %198 : vector<16x1xf32> to vector<16x64xf32>
    %202 = arith.subf %190, %201 : vector<16x64xf32>
    %203 = arith.mulf %200, %202 : vector<16x64xf32>
    %cst_89 = arith.constant dense<0.000000e+00> : vector<16xf32>
    %204 = vector.multi_reduction <add>, %203, %cst_89 [1] : vector<16x64xf32> to vector<16xf32>
    %205 = vector.shape_cast %204 : vector<16xf32> to vector<16x1xf32>
    %cst_90 = arith.constant 6.400000e+01 : f32
    %206 = vector.broadcast %cst_90 : f32 to vector<16x1xf32>
    %207 = arith.divf %205, %206 : vector<16x1xf32>
    %208 = vector.broadcast %198 : vector<16x1xf32> to vector<16x64xf32>
    %209 = arith.subf %190, %208 : vector<16x64xf32>
    %cst_91 = arith.constant 9.99999974E-6 : f32
    %210 = vector.broadcast %cst_91 : f32 to vector<16x1xf32>
    %211 = arith.addf %207, %210 : vector<16x1xf32>
    %212 = math.rsqrt %211 : vector<16x1xf32>
    %213 = vector.broadcast %212 : vector<16x1xf32> to vector<16x64xf32>
    %214 = arith.mulf %209, %213 : vector<16x64xf32>
    %215 = vector.broadcast %192 : vector<1x64xf32> to vector<16x64xf32>
    %216 = arith.mulf %214, %215 : vector<16x64xf32>
    %217 = vector.broadcast %194 : vector<1x64xf32> to vector<16x64xf32>
    %218 = arith.addf %216, %217 : vector<16x64xf32>
    %cst_92 = arith.constant 0.000000e+00 : f32
    %219 = vector.broadcast %cst_92 : f32 to vector<16x64xf32>
    %220 = arith.cmpf ogt, %218, %219 : vector<16x64xf32>
    %cst_93 = arith.constant 0.00999999977 : f32
    %221 = vector.broadcast %cst_93 : f32 to vector<16x64xf32>
    %222 = arith.mulf %221, %218 : vector<16x64xf32>
    %223 = arith.select %220, %218, %222 : vector<16x64xi1>, vector<16x64xf32>
    %224 = arith.truncf %223 : vector<16x64xf32> to vector<16x64xbf16>
    %c3 = arith.constant 3 : index
    %c0_94 = arith.constant 0 : index
    %c0_95 = arith.constant 0 : index
    %225 = vector.load %arg9[%c3, %c0_94, %c0_95] : memref<4x64x64xbf16, #tpu.memory_space<vmem>>, vector<1x64x64xbf16>
    %226 = vector.shape_cast %225 : vector<1x64x64xbf16> to vector<64x64xbf16>
    %cst_96 = arith.constant dense<0.000000e+00> : vector<16x64xf32>
    %227 = tpu.matmul %224, %226, %cst_96 {dimension_numbers = #tpu.dot_dimension_numbers<[1], [0], [0], [1], [0, 0, 1, 1], [], []>} : vector<16x64xbf16>, vector<64x64xbf16>, vector<16x64xf32> -> vector<16x64xf32>
    %c3_97 = arith.constant 3 : index
    %c0_98 = arith.constant 0 : index
    %c0_99 = arith.constant 0 : index
    %228 = vector.load %arg10[%c3_97, %c0_98, %c0_99] : memref<4x1x64xf32, #tpu.memory_space<vmem>>, vector<1x1x64xf32>
    %229 = vector.shape_cast %228 : vector<1x1x64xf32> to vector<1x64xf32>
    %230 = vector.broadcast %229 : vector<1x64xf32> to vector<16x64xf32>
    %231 = arith.addf %227, %230 : vector<16x64xf32>
    %c3_100 = arith.constant 3 : index
    %c0_101 = arith.constant 0 : index
    %c0_102 = arith.constant 0 : index
    %232 = vector.load %arg11[%c3_100, %c0_101, %c0_102] : memref<4x1x64xf32, #tpu.memory_space<vmem>>, vector<1x1x64xf32>
    %233 = vector.shape_cast %232 : vector<1x1x64xf32> to vector<1x64xf32>
    %c3_103 = arith.constant 3 : index
    %c0_104 = arith.constant 0 : index
    %c0_105 = arith.constant 0 : index
    %234 = vector.load %arg12[%c3_103, %c0_104, %c0_105] : memref<4x1x64xf32, #tpu.memory_space<vmem>>, vector<1x1x64xf32>
    %235 = vector.shape_cast %234 : vector<1x1x64xf32> to vector<1x64xf32>
    %cst_106 = arith.constant dense<0.000000e+00> : vector<16xf32>
    %236 = vector.multi_reduction <add>, %231, %cst_106 [1] : vector<16x64xf32> to vector<16xf32>
    %237 = vector.shape_cast %236 : vector<16xf32> to vector<16x1xf32>
    %cst_107 = arith.constant 6.400000e+01 : f32
    %238 = vector.broadcast %cst_107 : f32 to vector<16x1xf32>
    %239 = arith.divf %237, %238 : vector<16x1xf32>
    %240 = vector.broadcast %239 : vector<16x1xf32> to vector<16x64xf32>
    %241 = arith.subf %231, %240 : vector<16x64xf32>
    %242 = vector.broadcast %239 : vector<16x1xf32> to vector<16x64xf32>
    %243 = arith.subf %231, %242 : vector<16x64xf32>
    %244 = arith.mulf %241, %243 : vector<16x64xf32>
    %cst_108 = arith.constant dense<0.000000e+00> : vector<16xf32>
    %245 = vector.multi_reduction <add>, %244, %cst_108 [1] : vector<16x64xf32> to vector<16xf32>
    %246 = vector.shape_cast %245 : vector<16xf32> to vector<16x1xf32>
    %cst_109 = arith.constant 6.400000e+01 : f32
    %247 = vector.broadcast %cst_109 : f32 to vector<16x1xf32>
    %248 = arith.divf %246, %247 : vector<16x1xf32>
    %249 = vector.broadcast %239 : vector<16x1xf32> to vector<16x64xf32>
    %250 = arith.subf %231, %249 : vector<16x64xf32>
    %cst_110 = arith.constant 9.99999974E-6 : f32
    %251 = vector.broadcast %cst_110 : f32 to vector<16x1xf32>
    %252 = arith.addf %248, %251 : vector<16x1xf32>
    %253 = math.rsqrt %252 : vector<16x1xf32>
    %254 = vector.broadcast %253 : vector<16x1xf32> to vector<16x64xf32>
    %255 = arith.mulf %250, %254 : vector<16x64xf32>
    %256 = vector.broadcast %233 : vector<1x64xf32> to vector<16x64xf32>
    %257 = arith.mulf %255, %256 : vector<16x64xf32>
    %258 = vector.broadcast %235 : vector<1x64xf32> to vector<16x64xf32>
    %259 = arith.addf %257, %258 : vector<16x64xf32>
    %cst_111 = arith.constant 0.000000e+00 : f32
    %260 = vector.broadcast %cst_111 : f32 to vector<16x64xf32>
    %261 = arith.cmpf ogt, %259, %260 : vector<16x64xf32>
    %cst_112 = arith.constant 0.00999999977 : f32
    %262 = vector.broadcast %cst_112 : f32 to vector<16x64xf32>
    %263 = arith.mulf %262, %259 : vector<16x64xf32>
    %264 = arith.select %261, %259, %263 : vector<16x64xi1>, vector<16x64xf32>
    %265 = arith.truncf %264 : vector<16x64xf32> to vector<16x64xbf16>
    %c0_113 = arith.constant 0 : index
    %c0_114 = arith.constant 0 : index
    %266 = vector.load %arg13[%c0_113, %c0_114] : memref<64x32xbf16, #tpu.memory_space<vmem>>, vector<64x32xbf16>
    %cst_115 = arith.constant dense<0.000000e+00> : vector<16x32xf32>
    %267 = tpu.matmul %265, %266, %cst_115 {dimension_numbers = #tpu.dot_dimension_numbers<[1], [0], [0], [1], [0, 0, 1, 1], [], []>} : vector<16x64xbf16>, vector<64x32xbf16>, vector<16x32xf32> -> vector<16x32xf32>
    %c0_116 = arith.constant 0 : index
    %c0_117 = arith.constant 0 : index
    %268 = vector.load %arg14[%c0_116, %c0_117] : memref<1x32xf32, #tpu.memory_space<vmem>>, vector<1x32xf32>
    %269 = vector.broadcast %268 : vector<1x32xf32> to vector<16x32xf32>
    %270 = arith.addf %267, %269 : vector<16x32xf32>
    %271 = vector.shape_cast %270 : vector<16x32xf32> to vector<2x8x32xf32>
    %c0_118 = arith.constant 0 : index
    %c0_119 = arith.constant 0 : index
    %c0_120 = arith.constant 0 : index
    %272 = vector.load %arg15[%c0_118, %c0_119, %c0_120] : memref<2x8x32xf32, #tpu.memory_space<vmem>>, vector<2x8x32xf32>
    tpu.vector_store %arg15[%c0_118, %c0_119, %c0_120], %271 {strides = array<i32>} : memref<2x8x32xf32, #tpu.memory_space<vmem>>, vector<2x8x32xf32>,
    return
  }
  func.func @transform_0(%arg0: i32) -> (i32, i32, i32) {
    %c0_i32 = arith.constant 0 : i32
    %c0_i32_0 = arith.constant 0 : i32
    %c0_i32_1 = arith.constant 0 : i32
    return %arg0, %c0_i32, %c0_i32_0 : i32, i32, i32
  }
  func.func @transform_1(%arg0: i32) -> (i32, i32, i32) {
    %c0_i32 = arith.constant 0 : i32
    %c0_i32_0 = arith.constant 0 : i32
    %c0_i32_1 = arith.constant 0 : i32
    return %arg0, %c0_i32, %c0_i32_0 : i32, i32, i32
  }
  func.func @transform_2(%arg0: i32) -> (i32, i32) {
    %c0_i32 = arith.constant 0 : i32
    %c0_i32_0 = arith.constant 0 : i32
    %c0_i32_1 = arith.constant 0 : i32
    return %c0_i32, %c0_i32_0 : i32, i32
  }
  func.func @transform_3(%arg0: i32) -> (i32, i32) {
    %c0_i32 = arith.constant 0 : i32
    %c0_i32_0 = arith.constant 0 : i32
    %c0_i32_1 = arith.constant 0 : i32
    return %c0_i32, %c0_i32_0 : i32, i32
  }
  func.func @transform_4(%arg0: i32) -> (i32, i32) {
    %c0_i32 = arith.constant 0 : i32
    %c0_i32_0 = arith.constant 0 : i32
    %c0_i32_1 = arith.constant 0 : i32
    return %c0_i32, %c0_i32_0 : i32, i32
  }
  func.func @transform_5(%arg0: i32) -> (i32, i32) {
    %c0_i32 = arith.constant 0 : i32
    %c0_i32_0 = arith.constant 0 : i32
    %c0_i32_1 = arith.constant 0 : i32
    return %c0_i32, %c0_i32_0 : i32, i32
  }
  func.func @transform_6(%arg0: i32) -> (i32, i32) {
    %c0_i32 = arith.constant 0 : i32
    %c0_i32_0 = arith.constant 0 : i32
    %c0_i32_1 = arith.constant 0 : i32
    return %c0_i32, %c0_i32_0 : i32, i32
  }
  func.func @transform_7(%arg0: i32) -> (i32, i32) {
    %c0_i32 = arith.constant 0 : i32
    %c0_i32_0 = arith.constant 0 : i32
    %c0_i32_1 = arith.constant 0 : i32
    return %c0_i32, %c0_i32_0 : i32, i32
  }
  func.func @transform_8(%arg0: i32) -> (i32, i32, i32) {
    %c0_i32 = arith.constant 0 : i32
    %c0_i32_0 = arith.constant 0 : i32
    %c0_i32_1 = arith.constant 0 : i32
    %c0_i32_2 = arith.constant 0 : i32
    return %c0_i32, %c0_i32_0, %c0_i32_1 : i32, i32, i32
  }
  func.func @transform_9(%arg0: i32) -> (i32, i32, i32) {
    %c0_i32 = arith.constant 0 : i32
    %c0_i32_0 = arith.constant 0 : i32
    %c0_i32_1 = arith.constant 0 : i32
    %c0_i32_2 = arith.constant 0 : i32
    return %c0_i32, %c0_i32_0, %c0_i32_1 : i32, i32, i32
  }
  func.func @transform_10(%arg0: i32) -> (i32, i32, i32) {
    %c0_i32 = arith.constant 0 : i32
    %c0_i32_0 = arith.constant 0 : i32
    %c0_i32_1 = arith.constant 0 : i32
    %c0_i32_2 = arith.constant 0 : i32
    return %c0_i32, %c0_i32_0, %c0_i32_1 : i32, i32, i32
  }
  func.func @transform_11(%arg0: i32) -> (i32, i32, i32) {
    %c0_i32 = arith.constant 0 : i32
    %c0_i32_0 = arith.constant 0 : i32
    %c0_i32_1 = arith.constant 0 : i32
    %c0_i32_2 = arith.constant 0 : i32
    return %c0_i32, %c0_i32_0, %c0_i32_1 : i32, i32, i32
  }
  func.func @transform_12(%arg0: i32) -> (i32, i32) {
    %c0_i32 = arith.constant 0 : i32
    %c0_i32_0 = arith.constant 0 : i32
    %c0_i32_1 = arith.constant 0 : i32
    return %c0_i32, %c0_i32_0 : i32, i32
  }
  func.func @transform_13(%arg0: i32) -> (i32, i32) {
    %c0_i32 = arith.constant 0 : i32
    %c0_i32_0 = arith.constant 0 : i32
    %c0_i32_1 = arith.constant 0 : i32
    return %c0_i32, %c0_i32_0 : i32, i32
  }
  func.func @transform_14(%arg0: i32) -> (i32, i32, i32) {
    %c0_i32 = arith.constant 0 : i32
    %c0_i32_0 = arith.constant 0 : i32
    %c0_i32_1 = arith.constant 0 : i32
    return %arg0, %c0_i32, %c0_i32_0 : i32, i32, i32
  }
}

</mosaic_0001>

<llo_original>
// kernel: tpu_custom_call.1
$region0: #{tpu_custom_call.1}
  #allocation0 [shape = 'u32[]', space=smem, size = 0x4, offset = 0x4, fixed_abs, tag = 'smem constant byte address 0x4 - core index']
  #allocation1 [shape = 'u32[72,128]{1,0:T(1,128)}', space=vmem, size = 0x9000, scoped, tag = 'internal scratch']
  %s0 = inlined_call_operand.vmem [shape: f32[2,8,32], index: 0, kind: input, shape index: {}]
  %s1 = inlined_call_operand.vmem [shape: f32[2,16,32], index: 1, kind: input, shape index: {}]
  %s2 = inlined_call_operand.hbm [shape: bf16[32,32], index: 2, kind: input, shape index: {}]
  %s3 = inlined_call_operand.hbm [shape: f32[1,32], index: 3, kind: input, shape index: {}]
  %s4 = inlined_call_operand.hbm [shape: bf16[32,64], index: 4, kind: input, shape index: {}]
  %s5 = inlined_call_operand.hbm [shape: f32[1,64], index: 5, kind: input, shape index: {}]
  %s6 = inlined_call_operand.hbm [shape: bf16[32,32], index: 6, kind: input, shape index: {}]
  %s7 = inlined_call_operand.hbm [shape: f32[1,32], index: 7, kind: input, shape index: {}]
  %s8 = inlined_call_operand.hbm [shape: bf16[4,64,64], index: 8, kind: input, shape index: {}]
  %s9 = inlined_call_operand.vmem [shape: f32[4,1,64], index: 9, kind: input, shape index: {}]
  %s10 = inlined_call_operand.vmem [shape: f32[4,1,64], index: 10, kind: input, shape index: {}]
  %s11 = inlined_call_operand.hbm [shape: f32[4,1,64], index: 11, kind: input, shape index: {}]
  %s12 = inlined_call_operand.vmem [shape: bf16[64,32], index: 12, kind: input, shape index: {}]
  %s13 = inlined_call_operand.vmem [shape: f32[1,32], index: 13, kind: input, shape index: {}]
  %s14 = inlined_call_operand.hbm [shape: f32[2,8,32], index: 14, kind: output, shape index: {}]
  %s15 = sld [smem:[#allocation0]]
  $region98: #{tpu_custom_call.1} parent=0
    _
  %s17 = ssub.s32 1, %s15
  %s18 = scalar_select 0, %s17, %s15
  $region1: #{tpu_custom_call.1} parent=0
    #allocation2 [shape = 'u8[8192]{0}', space=vmem, size = 0x2000, scoped, tag = 'input window, operand 2, single buffered']
    #allocation3 [shape = 's32[1]{0}', space=sflag, size = 0x4, scoped, tag = 'scoped memory for tpu_custom_call.1']
    #allocation4 [shape = 's32[1]{0}', space=sflag, size = 0x4, scoped, tag = 'scoped memory for tpu_custom_call.1']
    #allocation5 [shape = 'u8[512]{0}', space=vmem, size = 0x400, scoped, tag = 'input window, operand 3, single buffered']
    #allocation6 [shape = 's32[1]{0}', space=sflag, size = 0x4, scoped, tag = 'scoped memory for tpu_custom_call.1']
    #allocation7 [shape = 'u8[8192]{0}', space=vmem, size = 0x2000, scoped, tag = 'input window, operand 4, single buffered']
    #allocation8 [shape = 'u8[512]{0}', space=vmem, size = 0x400, scoped, tag = 'input window, operand 5, single buffered']
    #allocation9 [shape = 's32[1]{0}', space=sflag, size = 0x4, scoped, tag = 'scoped memory for tpu_custom_call.1']
    #allocation10 [shape = 'u8[8192]{0}', space=vmem, size = 0x2000, scoped, tag = 'input window, operand 6, single buffered']
    #allocation11 [shape = 'u8[512]{0}', space=vmem, size = 0x400, scoped, tag = 'input window, operand 7, single buffered']
    #allocation12 [shape = 's32[1]{0}', space=sflag, size = 0x4, scoped, tag = 'scoped memory for tpu_custom_call.1']
    #allocation13 [shape = 'u8[65536]{0}', space=vmem, size = 0x10000, scoped, tag = 'input window, operand 8, single buffered']
    #allocation14 [shape = 'u8[2048]{0}', space=vmem, size = 0x800, scoped, tag = 'input window, operand 11, single buffered']
    #allocation15 [shape = 's32[1]{0}', space=sflag, size = 0x4, scoped, tag = 'scoped memory for tpu_custom_call.1']
    #allocation16 [shape = 'u8[8192]{0}', space=vmem, size = 0x2000, scoped, tag = 'output window, operand 0, single buffered']
    %19 = vsyncpa [#allocation3], 0
    %20 = vsyncpa [#allocation6], 0
    %21 = vsyncpa [#allocation9], 0
    %22 = vsyncpa [#allocation12], 0
    %23 = vsyncpa [#allocation15], 0
    %24 = vsyncpa [#allocation4], 0
    // Predicated region
    $region2: #{tpu_custom_call.1} parent=1 // pred_check
      _
    $region3: #{tpu_custom_call.1} parent=1 // pred_check_branch
      %26 = sbr.rel (0) target = $region5
    $region4: #{tpu_custom_call.1} parent=1 // pred_region
      _
    $region5: #{tpu_custom_call.1} parent=1 // pred_fallthru
      _
    // Predicated region
    $region6: #{tpu_custom_call.1} parent=1 // pred_check
      _
    $region7: #{tpu_custom_call.1} parent=1 // pred_check_branch
      %28 = sbr.rel (0) target = $region9
    $region8: #{tpu_custom_call.1} parent=1 // pred_region
      _
    $region9: #{tpu_custom_call.1} parent=1 // pred_fallthru
      _
    // Predicated region
    $region10: #{tpu_custom_call.1} parent=1 // pred_check
      _
    $region11: #{tpu_custom_call.1} parent=1 // pred_check_branch
      %30 = sbr.rel (0) target = $region13
    $region12: #{tpu_custom_call.1} parent=1 // pred_region
      %32 = vsyncadd [#allocation3], 0
      %s33 = sshll.u32 %s2, 4
      %s34 = int_to_ptr.hbm [resolvable:$true] %s33
      %s35 = sshll.u32 [#allocation2], 4
      %s36 = int_to_ptr.vmem [resolvable:$true] %s35
      %41 = dma.hbm_to_vmem [thread:$0]  %s34, 256, %s36, [#allocation3], 64, 64, 4
    $region13: #{tpu_custom_call.1} parent=1 // pred_fallthru
      _
    // Predicated region
    $region14: #{tpu_custom_call.1} parent=1 // pred_check
      _
    $region15: #{tpu_custom_call.1} parent=1 // pred_check_branch
      %43 = sbr.rel (0) target = $region17
    $region16: #{tpu_custom_call.1} parent=1 // pred_region
      %45 = vsyncadd [#allocation6], 0
      %s47 = sshll.u32 %s3, 4
      %s48 = int_to_ptr.hbm [resolvable:$true] %s47
      %s49 = sshll.u32 [#allocation5], 4
      %s50 = int_to_ptr.vmem [resolvable:$true] %s49
      %52 = dma.hbm_to_vmem [thread:$0]  %s48, 16, %s50, [#allocation6]
    $region17: #{tpu_custom_call.1} parent=1 // pred_fallthru
      _
    // Predicated region
    $region18: #{tpu_custom_call.1} parent=1 // pred_check
      _
    $region19: #{tpu_custom_call.1} parent=1 // pred_check_branch
      %54 = sbr.rel (0) target = $region21
    $region20: #{tpu_custom_call.1} parent=1 // pred_region
      %56 = vsyncadd [#allocation6], 0
      %s57 = sshll.u32 %s4, 4
      %s58 = int_to_ptr.hbm [resolvable:$true] %s57
      %s59 = sshll.u32 [#allocation7], 4
      %s60 = int_to_ptr.vmem [resolvable:$true] %s59
      %65 = dma.hbm_to_vmem [thread:$0]  %s58, 256, %s60, [#allocation6], 64, 64, 4
    $region21: #{tpu_custom_call.1} parent=1 // pred_fallthru
      _
    // Predicated region
    $region22: #{tpu_custom_call.1} parent=1 // pred_check
      _
    $region23: #{tpu_custom_call.1} parent=1 // pred_check_branch
      %67 = sbr.rel (0) target = $region25
    $region24: #{tpu_custom_call.1} parent=1 // pred_region
      %69 = vsyncadd [#allocation9], 0
      %s71 = sshll.u32 %s5, 4
      %s72 = int_to_ptr.hbm [resolvable:$true] %s71
      %s73 = sshll.u32 [#allocation8], 4
      %s74 = int_to_ptr.vmem [resolvable:$true] %s73
      %76 = dma.hbm_to_vmem [thread:$0]  %s72, 16, %s74, [#allocation9]
    $region25: #{tpu_custom_call.1} parent=1 // pred_fallthru
      _
    // Predicated region
    $region26: #{tpu_custom_call.1} parent=1 // pred_check
      _
    $region27: #{tpu_custom_call.1} parent=1 // pred_check_branch
      %78 = sbr.rel (0) target = $region29
    $region28: #{tpu_custom_call.1} parent=1 // pred_region
      %80 = vsyncadd [#allocation9], 0
      %s81 = sshll.u32 %s6, 4
      %s82 = int_to_ptr.hbm [resolvable:$true] %s81
      %s83 = sshll.u32 [#allocation10], 4
      %s84 = int_to_ptr.vmem [resolvable:$true] %s83
      %89 = dma.hbm_to_vmem [thread:$0]  %s82, 256, %s84, [#allocation9], 64, 64, 4
    $region29: #{tpu_custom_call.1} parent=1 // pred_fallthru
      _
    // Predicated region
    $region30: #{tpu_custom_call.1} parent=1 // pred_check
      _
    $region31: #{tpu_custom_call.1} parent=1 // pred_check_branch
      %91 = sbr.rel (0) target = $region33
    $region32: #{tpu_custom_call.1} parent=1 // pred_region
      %93 = vsyncadd [#allocation12], 0
      %s95 = sshll.u32 %s7, 4
      %s96 = int_to_ptr.hbm [resolvable:$true] %s95
      %s97 = sshll.u32 [#allocation11], 4
      %s98 = int_to_ptr.vmem [resolvable:$true] %s97
      %100 = dma.hbm_to_vmem [thread:$0]  %s96, 16, %s98, [#allocation12]
    $region33: #{tpu_custom_call.1} parent=1 // pred_fallthru
      _
    // Predicated region
    $region34: #{tpu_custom_call.1} parent=1 // pred_check
      _
    $region35: #{tpu_custom_call.1} parent=1 // pred_check_branch
      %102 = sbr.rel (0) target = $region37
    $region36: #{tpu_custom_call.1} parent=1 // pred_region
      %104 = vsyncadd [#allocation12], 0
      %s105 = sshll.u32 %s8, 4
      %s106 = int_to_ptr.hbm [resolvable:$true] %s105
      %s107 = sshll.u32 [#allocation13], 4
      %s108 = int_to_ptr.vmem [resolvable:$true] %s107
      %113 = dma.hbm_to_vmem [thread:$0]  %s106, 2048, %s108, [#allocation12], 64, 64, 4
    $region37: #{tpu_custom_call.1} parent=1 // pred_fallthru
      _
    // Predicated region
    $region38: #{tpu_custom_call.1} parent=1 // pred_check
      _
    $region39: #{tpu_custom_call.1} parent=1 // pred_check_branch
      %115 = sbr.rel (0) target = $region41
    $region40: #{tpu_custom_call.1} parent=1 // pred_region
      _
    $region41: #{tpu_custom_call.1} parent=1 // pred_fallthru
      _
    // Predicated region
    $region42: #{tpu_custom_call.1} parent=1 // pred_check
      _
    $region43: #{tpu_custom_call.1} parent=1 // pred_check_branch
      %117 = sbr.rel (0) target = $region45
    $region44: #{tpu_custom_call.1} parent=1 // pred_region
      _
    $region45: #{tpu_custom_call.1} parent=1 // pred_fallthru
      _
    // Predicated region
    $region46: #{tpu_custom_call.1} parent=1 // pred_check
      _
    $region47: #{tpu_custom_call.1} parent=1 // pred_check_branch
      %119 = sbr.rel (0) target = $region49
    $region48: #{tpu_custom_call.1} parent=1 // pred_region
      %121 = vsyncadd [#allocation15], 0
      %s122 = sshll.u32 %s11, 4
      %s123 = int_to_ptr.hbm [resolvable:$true] %s122
      %s124 = sshll.u32 [#allocation14], 4
      %s125 = int_to_ptr.vmem [resolvable:$true] %s124
      %130 = dma.hbm_to_vmem [thread:$0]  %s123, 64, %s125, [#allocation15], 16, 16, 1
    $region49: #{tpu_custom_call.1} parent=1 // pred_fallthru
      _
    // Predicated region
    $region50: #{tpu_custom_call.1} parent=1 // pred_check
      _
    $region51: #{tpu_custom_call.1} parent=1 // pred_check_branch
      %132 = sbr.rel (0) target = $region53
    $region52: #{tpu_custom_call.1} parent=1 // pred_region
      _
    $region53: #{tpu_custom_call.1} parent=1 // pred_fallthru
      _
    // Predicated region
    $region54: #{tpu_custom_call.1} parent=1 // pred_check
      _
    $region55: #{tpu_custom_call.1} parent=1 // pred_check_branch
      %134 = sbr.rel (0) target = $region57
    $region56: #{tpu_custom_call.1} parent=1 // pred_region
      _
    $region57: #{tpu_custom_call.1} parent=1 // pred_fallthru
      _
    // Predicated region
    $region58: #{tpu_custom_call.1} parent=1 // pred_check
      _
    $region59: #{tpu_custom_call.1} parent=1 // pred_check_branch
      %136 = sbr.rel (0) target = $region61
    $region60: #{tpu_custom_call.1} parent=1 // pred_region
      %138 = dma.done [#allocation3], 256
    $region61: #{tpu_custom_call.1} parent=1 // pred_fallthru
      _
    // Predicated region
    $region62: #{tpu_custom_call.1} parent=1 // pred_check
      _
    $region63: #{tpu_custom_call.1} parent=1 // pred_check_branch
      %140 = sbr.rel (0) target = $region65
    $region64: #{tpu_custom_call.1} parent=1 // pred_region
      %142 = dma.done [#allocation6], 16
    $region65: #{tpu_custom_call.1} parent=1 // pred_fallthru
      _
    // Predicated region
    $region66: #{tpu_custom_call.1} parent=1 // pred_check
      _
    $region67: #{tpu_custom_call.1} parent=1 // pred_check_branch
      %144 = sbr.rel (0) target = $region69
    $region68: #{tpu_custom_call.1} parent=1 // pred_region
      %146 = dma.done [#allocation6], 256
    $region69: #{tpu_custom_call.1} parent=1 // pred_fallthru
      _
    // Predicated region
    $region70: #{tpu_custom_call.1} parent=1 // pred_check
      _
    $region71: #{tpu_custom_call.1} parent=1 // pred_check_branch
      %148 = sbr.rel (0) target = $region73
    $region72: #{tpu_custom_call.1} parent=1 // pred_region
      %150 = dma.done [#allocation9], 16
    $region73: #{tpu_custom_call.1} parent=1 // pred_fallthru
      _
    // Predicated region
    $region74: #{tpu_custom_call.1} parent=1 // pred_check
      _
    $region75: #{tpu_custom_call.1} parent=1 // pred_check_branch
      %152 = sbr.rel (0) target = $region77
    $region76: #{tpu_custom_call.1} parent=1 // pred_region
      %154 = dma.done [#allocation9], 256
    $region77: #{tpu_custom_call.1} parent=1 // pred_fallthru
      _
    // Predicated region
    $region78: #{tpu_custom_call.1} parent=1 // pred_check
      _
    $region79: #{tpu_custom_call.1} parent=1 // pred_check_branch
      %156 = sbr.rel (0) target = $region81
    $region80: #{tpu_custom_call.1} parent=1 // pred_region
      %158 = dma.done [#allocation12], 16
    $region81: #{tpu_custom_call.1} parent=1 // pred_fallthru
      _
    // Predicated region
    $region82: #{tpu_custom_call.1} parent=1 // pred_check
      _
    $region83: #{tpu_custom_call.1} parent=1 // pred_check_branch
      %160 = sbr.rel (0) target = $region85
    $region84: #{tpu_custom_call.1} parent=1 // pred_region
      %162 = dma.done [#allocation12], 2048
    $region85: #{tpu_custom_call.1} parent=1 // pred_fallthru
      _
    // Predicated region
    $region86: #{tpu_custom_call.1} parent=1 // pred_check
      _
    $region87: #{tpu_custom_call.1} parent=1 // pred_check_branch
      %164 = sbr.rel (0) target = $region89
    $region88: #{tpu_custom_call.1} parent=1 // pred_region
      %166 = dma.done [#allocation15], 64
    $region89: #{tpu_custom_call.1} parent=1 // pred_fallthru
      _
    %v168 = vld [vmem:[%s0] sm:$0xff]
    %v169 = vld [vmem:[%s0 + $0x8] sm:$0xff]
    %v170 = vld [vmem:[%s1] sm:$0xff]
    %v171 = vld [vmem:[%s1 + $0x8] sm:$0xff]
    %v172 = vld [vmem:[%s1 + $0x10] sm:$0xff]
    %v173 = vld [vmem:[%s1 + $0x18] sm:$0xff]
    %v174 = vpack.c.bf16 %v169, %v168
    %v175 = vld [vmem:[#allocation2] sm:$0xf]
    %v176 = vld [vmem:[#allocation2 + $0x4] sm:$0xf]
    %v177 = vld [vmem:[#allocation2 + $0x8] sm:$0xf]
    %v178 = vld [vmem:[#allocation2 + $0xc] sm:$0xf]
    %v179 = vld [vmem:[#allocation5] sm:$0x1]
    %v181 = vperm.slane %v179, 0
    %v187 = vunpack.c.l.b16 %v175
    %v188 = vunpack.c.l.b16 %v176
    %v189 = vunpack.c.l.b16 %v177
    %v190 = vunpack.c.l.b16 %v178
    %v191 = vpack.c.b16 %v188, %v187
    %v192 = vpack.c.b16 %v190, %v189
    %vm195 = vcmask 261120
    %v197 = vsel %vm195, %v174, 0
    %199 = vmatpush.bf16.msra.mxu0 0
    %200 = vmatpush.bf16.msra.mxu0 0
    %201 = vmatpush.bf16.msra.mxu0 0
    %202 = vmatpush.bf16.msra.mxu0 0
    %203 = vmatpush.bf16.msra.mxu0 0
    %204 = vmatpush.bf16.msra.mxu0 0
    %205 = vmatpush.bf16.msra.mxu0 %v192
    %206 = vmatpush.bf16.msra.mxu0 %v191
    %207 = vmatmul.bf16.gmra.mxu0 %v197
    %v208 = vpop.f32.mrf.mxu0
    %v209 = vadd.f32 %v181, %v208
    %v210 = vpop.f32.mrf.mxu0
    %v211 = vadd.f32 %v181, %v210
    %212 = vdwg.mxu0
    %v213 = vpack.c.bf16 %v171, %v170
    %v214 = vpack.c.bf16 %v173, %v172
    %v215 = vld [vmem:[#allocation7] sm:$0xf]
    %v216 = vld [vmem:[#allocation7 + $0x4] sm:$0xf]
    %v217 = vld [vmem:[#allocation7 + $0x8] sm:$0xf]
    %v218 = vld [vmem:[#allocation7 + $0xc] sm:$0xf]
    %v219 = vld [vmem:[#allocation8] sm:$0x1]
    %v221 = vperm.slane %v219, 0
    %v227 = vunpack.c.l.b16 %v215
    %v228 = vunpack.c.l.b16 %v216
    %v229 = vunpack.c.l.b16 %v217
    %v230 = vunpack.c.l.b16 %v218
    %v231 = vpack.c.b16 %v228, %v227
    %v232 = vpack.c.b16 %v230, %v229
    %v236 = vsel %vm195, %v213, 0
    %v239 = vsel %vm195, %v214, 0
    %241 = vmatpush.bf16.msra.mxu0 0
    %242 = vmatpush.bf16.msra.mxu0 0
    %243 = vmatpush.bf16.msra.mxu0 0
    %244 = vmatpush.bf16.msra.mxu0 0
    %245 = vmatpush.bf16.msra.mxu0 0
    %246 = vmatpush.bf16.msra.mxu0 0
    %247 = vmatpush.bf16.msra.mxu0 %v232
    %248 = vmatpush.bf16.msra.mxu0 %v231
    %249 = vmatmul.bf16.gmra.mxu0 %v236
    %v250 = vpop.f32.mrf.mxu0
    %v251 = vadd.f32 %v221, %v250
    %v252 = vpop.f32.mrf.mxu0
    %v253 = vadd.f32 %v221, %v252
    %254 = vmatmul.bf16.gmra.mxu0 %v239
    %v255 = vpop.f32.mrf.mxu0
    %v256 = vadd.f32 %v221, %v255
    %v257 = vpop.f32.mrf.mxu0
    %v258 = vadd.f32 %v221, %v257
    %259 = vdwg.mxu0
    %v260 = vpack.c.bf16 %v209, %v209
    %v261 = vpack.c.bf16 %v211, %v211
    %v262 = vpack.c.bf16 %v251, %v251
    %v263 = vpack.c.bf16 %v253, %v253
    %v264 = vpack.c.bf16 %v256, %v256
    %v265 = vpack.c.bf16 %v258, %v258
    %v268 = vunpack.c.l.b16 %v262
    %v269 = vunpack.c.l.b16 %v263
    %v270 = vpack.c.b16 %v269, %v268
    %vm271 = vcmask 64512
    %v273 = vsel %vm271, %v260, 0
    %v276 = vsel %vm271, %v270, 0
    %278 = vmatpush.bf16.xpose.msra.mxu0 0
    %279 = vmatpush.bf16.xpose.msra.mxu0 0
    %280 = vmatpush.bf16.xpose.msra.mxu0 0
    %281 = vmatpush.bf16.xpose.msra.mxu0 0
    %282 = vmatpush.bf16.xpose.msra.mxu0 0
    %283 = vmatpush.bf16.xpose.msra.mxu0 0
    %284 = vmatpush.bf16.xpose.msra.mxu0 0
    %285 = vmatpush.bf16.xpose.msra.mxu0 %v276
    %286 = vmatmul.bf16.gmra.mxu0 %v273
    %v287 = vpop.f32.mrf.mxu0
    %v288 = vadd.f32 0.0, %v287
    %v289 = vpop.f32.mrf.mxu0
    %290 = vdwg.mxu0
    %v293 = vunpack.c.l.b16 %v264
    %v294 = vunpack.c.l.b16 %v265
    %v295 = vpack.c.b16 %v294, %v293
    %v297 = vsel %vm271, %v261, 0
    %v300 = vsel %vm271, %v295, 0
    %302 = vmatpush.bf16.xpose.msra.mxu0 0
    %303 = vmatpush.bf16.xpose.msra.mxu0 0
    %304 = vmatpush.bf16.xpose.msra.mxu0 0
    %305 = vmatpush.bf16.xpose.msra.mxu0 0
    %306 = vmatpush.bf16.xpose.msra.mxu0 0
    %307 = vmatpush.bf16.xpose.msra.mxu0 0
    %308 = vmatpush.bf16.xpose.msra.mxu0 0
    %309 = vmatpush.bf16.xpose.msra.mxu0 %v300
    %310 = vmatmul.bf16.gmra.mxu0 %v297
    %v311 = vpop.f32.mrf.mxu0
    %v312 = vadd.f32 0.0, %v311
    %v313 = vpop.f32.mrf.mxu0
    %314 = vdwg.mxu0
    %vm315 = vcmask 130048
    %v316 = vsel %vm315, %v288, -inf
    %317 = vmax.xlane.f32.xlu0 %v316
    %v318 = vpop.xlane.xlu0 %317
    %v319 = vsel %vm315, %v312, -inf
    %320 = vmax.xlane.f32.xlu0 %v319
    %v321 = vpop.xlane.xlu0 %320
    %v322 = vsub.f32 %v288, %v318
    %v323 = vsub.f32 %v312, %v321
    %v324 = vmul.f32 %v322, 1.442695
    %v325 = vpow.pop %v324
    %v326 = vmul.f32 %v323, 1.442695
    %v327 = vpow.pop %v326
    %v328 = vsel %vm315, %v325, 0.0
    %329 = vadd.xlane.f32.xlu0 %v328
    %v330 = vpop.xlane.xlu0 %329
    %v331 = vsel %vm315, %v327, 0.0
    %332 = vadd.xlane.f32.xlu0 %v331
    %v333 = vpop.xlane.xlu0 %332
    %v334 = vrcp.pop %v330
    %v335 = vrcp.pop %v333
    %v336 = vmul.f32 %v325, %v334
    %v337 = vmul.f32 %v327, %v335
    %v338 = vpack.c.bf16 %v336, %v336
    %v339 = vpack.c.bf16 %v337, %v337
    %340 = vrot.lane.b32.xlu0 %v270, 96
    %v341 = vpop.permute.xlu0 %340
    %v344 = vsel %vm315, %v338, 0
    %346 = vmatpush.bf16.msra.mxu0 0
    %347 = vmatpush.bf16.msra.mxu0 0
    %348 = vmatpush.bf16.msra.mxu0 0
    %349 = vmatpush.bf16.msra.mxu0 0
    %350 = vmatpush.bf16.msra.mxu0 0
    %351 = vmatpush.bf16.msra.mxu0 0
    %352 = vmatpush.bf16.msra.mxu0 0
    %353 = vmatpush.bf16.msra.mxu0 %v341
    %354 = vmatmul.bf16.gmra.mxu0 %v344
    %v355 = vpop.f32.mrf.mxu0
    %v356 = vadd.f32 0.0, %v355
    %v357 = vpop.f32.mrf.mxu0
    %358 = vdwg.mxu0
    %359 = vrot.lane.b32.xlu0 %v295, 96
    %v360 = vpop.permute.xlu0 %359
    %v363 = vsel %vm315, %v339, 0
    %365 = vmatpush.bf16.msra.mxu0 0
    %366 = vmatpush.bf16.msra.mxu0 0
    %367 = vmatpush.bf16.msra.mxu0 0
    %368 = vmatpush.bf16.msra.mxu0 0
    %369 = vmatpush.bf16.msra.mxu0 0
    %370 = vmatpush.bf16.msra.mxu0 0
    %371 = vmatpush.bf16.msra.mxu0 0
    %372 = vmatpush.bf16.msra.mxu0 %v360
    %373 = vmatmul.bf16.gmra.mxu0 %v363
    %v374 = vpop.f32.mrf.mxu0
    %v375 = vadd.f32 0.0, %v374
    %v376 = vpop.f32.mrf.mxu0
    %377 = vdwg.mxu0
    %v379 = vunpack.c.l.b16 %v260
    %v380 = vpack.c.b16 %v379, %v379
    %381 = vrot.lane.b32.xlu0 %v380, 120
    %v382 = vpop.permute.xlu0 %381
    %383 = vrot.lane.b32.xlu0 %v270, 120
    %v384 = vpop.permute.xlu0 %383
    %v386 = vsel %vm271, %v382, 0
    %v389 = vsel %vm271, %v384, 0
    %391 = vmatpush.bf16.xpose.msra.mxu0 0
    %392 = vmatpush.bf16.xpose.msra.mxu0 0
    %393 = vmatpush.bf16.xpose.msra.mxu0 0
    %394 = vmatpush.bf16.xpose.msra.mxu0 0
    %395 = vmatpush.bf16.xpose.msra.mxu0 0
    %396 = vmatpush.bf16.xpose.msra.mxu0 0
    %397 = vmatpush.bf16.xpose.msra.mxu0 0
    %398 = vmatpush.bf16.xpose.msra.mxu0 %v389
    %399 = vmatmul.bf16.gmra.mxu0 %v386
    %v400 = vpop.f32.mrf.mxu0
    %v401 = vadd.f32 0.0, %v400
    %v402 = vpop.f32.mrf.mxu0
    %403 = vdwg.mxu0
    %v405 = vunpack.c.l.b16 %v261
    %v406 = vpack.c.b16 %v405, %v405
    %407 = vrot.lane.b32.xlu0 %v406, 120
    %v408 = vpop.permute.xlu0 %407
    %409 = vrot.lane.b32.xlu0 %v295, 120
    %v410 = vpop.permute.xlu0 %409
    %v412 = vsel %vm271, %v408, 0
    %v415 = vsel %vm271, %v410, 0
    %417 = vmatpush.bf16.xpose.msra.mxu0 0
    %418 = vmatpush.bf16.xpose.msra.mxu0 0
    %419 = vmatpush.bf16.xpose.msra.mxu0 0
    %420 = vmatpush.bf16.xpose.msra.mxu0 0
    %421 = vmatpush.bf16.xpose.msra.mxu0 0
    %422 = vmatpush.bf16.xpose.msra.mxu0 0
    %423 = vmatpush.bf16.xpose.msra.mxu0 0
    %424 = vmatpush.bf16.xpose.msra.mxu0 %v415
    %425 = vmatmul.bf16.gmra.mxu0 %v412
    %v426 = vpop.f32.mrf.mxu0
    %v427 = vadd.f32 0.0, %v426
    %v428 = vpop.f32.mrf.mxu0
    %429 = vdwg.mxu0
    %v430 = vsel %vm315, %v401, -inf
    %431 = vmax.xlane.f32.xlu0 %v430
    %v432 = vpop.xlane.xlu0 %431
    %v433 = vsel %vm315, %v427, -inf
    %434 = vmax.xlane.f32.xlu0 %v433
    %v435 = vpop.xlane.xlu0 %434
    %v436 = vsub.f32 %v401, %v432
    %v437 = vsub.f32 %v427, %v435
    %v438 = vmul.f32 %v436, 1.442695
    %v439 = vpow.pop %v438
    %v440 = vmul.f32 %v437, 1.442695
    %v441 = vpow.pop %v440
    %v442 = vsel %vm315, %v439, 0.0
    %443 = vadd.xlane.f32.xlu0 %v442
    %v444 = vpop.xlane.xlu0 %443
    %v445 = vsel %vm315, %v441, 0.0
    %446 = vadd.xlane.f32.xlu0 %v445
    %v447 = vpop.xlane.xlu0 %446
    %v448 = vrcp.pop %v444
    %v449 = vrcp.pop %v447
    %v450 = vmul.f32 %v439, %v448
    %v451 = vmul.f32 %v441, %v449
    %v452 = vpack.c.bf16 %v450, %v450
    %v453 = vpack.c.bf16 %v451, %v451
    %454 = vrot.lane.b32.xlu0 %v270, 88
    %v455 = vpop.permute.xlu0 %454
    %v458 = vsel %vm315, %v452, 0
    %460 = vmatpush.bf16.msra.mxu0 0
    %461 = vmatpush.bf16.msra.mxu0 0
    %462 = vmatpush.bf16.msra.mxu0 0
    %463 = vmatpush.bf16.msra.mxu0 0
    %464 = vmatpush.bf16.msra.mxu0 0
    %465 = vmatpush.bf16.msra.mxu0 0
    %466 = vmatpush.bf16.msra.mxu0 0
    %467 = vmatpush.bf16.msra.mxu0 %v455
    %468 = vmatmul.bf16.gmra.mxu0 %v458
    %v469 = vpop.f32.mrf.mxu0
    %v470 = vadd.f32 0.0, %v469
    %v471 = vpop.f32.mrf.mxu0
    %472 = vdwg.mxu0
    %473 = vrot.lane.b32.xlu0 %v295, 88
    %v474 = vpop.permute.xlu0 %473
    %v477 = vsel %vm315, %v453, 0
    %479 = vmatpush.bf16.msra.mxu0 0
    %480 = vmatpush.bf16.msra.mxu0 0
    %481 = vmatpush.bf16.msra.mxu0 0
    %482 = vmatpush.bf16.msra.mxu0 0
    %483 = vmatpush.bf16.msra.mxu0 0
    %484 = vmatpush.bf16.msra.mxu0 0
    %485 = vmatpush.bf16.msra.mxu0 0
    %486 = vmatpush.bf16.msra.mxu0 %v474
    %487 = vmatmul.bf16.gmra.mxu0 %v477
    %v488 = vpop.f32.mrf.mxu0
    %v489 = vadd.f32 0.0, %v488
    %v490 = vpop.f32.mrf.mxu0
    %491 = vdwg.mxu0
    %492 = vrot.lane.b32.xlu0 %v380, 112
    %v493 = vpop.permute.xlu0 %492
    %494 = vrot.lane.b32.xlu0 %v270, 112
    %v495 = vpop.permute.xlu0 %494
    %v497 = vsel %vm271, %v493, 0
    %v500 = vsel %vm271, %v495, 0
    %502 = vmatpush.bf16.xpose.msra.mxu0 0
    %503 = vmatpush.bf16.xpose.msra.mxu0 0
    %504 = vmatpush.bf16.xpose.msra.mxu0 0
    %505 = vmatpush.bf16.xpose.msra.mxu0 0
    %506 = vmatpush.bf16.xpose.msra.mxu0 0
    %507 = vmatpush.bf16.xpose.msra.mxu0 0
    %508 = vmatpush.bf16.xpose.msra.mxu0 0
    %509 = vmatpush.bf16.xpose.msra.mxu0 %v500
    %510 = vmatmul.bf16.gmra.mxu0 %v497
    %v511 = vpop.f32.mrf.mxu0
    %v512 = vadd.f32 0.0, %v511
    %v513 = vpop.f32.mrf.mxu0
    %514 = vdwg.mxu0
    %515 = vrot.lane.b32.xlu0 %v406, 112
    %v516 = vpop.permute.xlu0 %515
    %517 = vrot.lane.b32.xlu0 %v295, 112
    %v518 = vpop.permute.xlu0 %517
    %v520 = vsel %vm271, %v516, 0
    %v523 = vsel %vm271, %v518, 0
    %525 = vmatpush.bf16.xpose.msra.mxu0 0
    %526 = vmatpush.bf16.xpose.msra.mxu0 0
    %527 = vmatpush.bf16.xpose.msra.mxu0 0
    %528 = vmatpush.bf16.xpose.msra.mxu0 0
    %529 = vmatpush.bf16.xpose.msra.mxu0 0
    %530 = vmatpush.bf16.xpose.msra.mxu0 0
    %531 = vmatpush.bf16.xpose.msra.mxu0 0
    %532 = vmatpush.bf16.xpose.msra.mxu0 %v523
    %533 = vmatmul.bf16.gmra.mxu0 %v520
    %v534 = vpop.f32.mrf.mxu0
    %v535 = vadd.f32 0.0, %v534
    %v536 = vpop.f32.mrf.mxu0
    %537 = vdwg.mxu0
    %v538 = vsel %vm315, %v512, -inf
    %539 = vmax.xlane.f32.xlu0 %v538
    %v540 = vpop.xlane.xlu0 %539
    %v541 = vsel %vm315, %v535, -inf
    %542 = vmax.xlane.f32.xlu0 %v541
    %v543 = vpop.xlane.xlu0 %542
    %v544 = vsub.f32 %v512, %v540
    %v545 = vsub.f32 %v535, %v543
    %v546 = vmul.f32 %v544, 1.442695
    %v547 = vpow.pop %v546
    %v548 = vmul.f32 %v545, 1.442695
    %v549 = vpow.pop %v548
    %v550 = vsel %vm315, %v547, 0.0
    %551 = vadd.xlane.f32.xlu0 %v550
    %v552 = vpop.xlane.xlu0 %551
    %v553 = vsel %vm315, %v549, 0.0
    %554 = vadd.xlane.f32.xlu0 %v553
    %v555 = vpop.xlane.xlu0 %554
    %v556 = vrcp.pop %v552
    %v557 = vrcp.pop %v555
    %v558 = vmul.f32 %v547, %v556
    %v559 = vmul.f32 %v549, %v557
    %v560 = vpack.c.bf16 %v558, %v558
    %v561 = vpack.c.bf16 %v559, %v559
    %562 = vrot.lane.b32.xlu0 %v270, 80
    %v563 = vpop.permute.xlu0 %562
    %v566 = vsel %vm315, %v560, 0
    %568 = vmatpush.bf16.msra.mxu0 0
    %569 = vmatpush.bf16.msra.mxu0 0
    %570 = vmatpush.bf16.msra.mxu0 0
    %571 = vmatpush.bf16.msra.mxu0 0
    %572 = vmatpush.bf16.msra.mxu0 0
    %573 = vmatpush.bf16.msra.mxu0 0
    %574 = vmatpush.bf16.msra.mxu0 0
    %575 = vmatpush.bf16.msra.mxu0 %v563
    %576 = vmatmul.bf16.gmra.mxu0 %v566
    %v577 = vpop.f32.mrf.mxu0
    %v578 = vadd.f32 0.0, %v577
    %v579 = vpop.f32.mrf.mxu0
    %580 = vdwg.mxu0
    %581 = vrot.lane.b32.xlu0 %v295, 80
    %v582 = vpop.permute.xlu0 %581
    %v585 = vsel %vm315, %v561, 0
    %587 = vmatpush.bf16.msra.mxu0 0
    %588 = vmatpush.bf16.msra.mxu0 0
    %589 = vmatpush.bf16.msra.mxu0 0
    %590 = vmatpush.bf16.msra.mxu0 0
    %591 = vmatpush.bf16.msra.mxu0 0
    %592 = vmatpush.bf16.msra.mxu0 0
    %593 = vmatpush.bf16.msra.mxu0 0
    %594 = vmatpush.bf16.msra.mxu0 %v582
    %595 = vmatmul.bf16.gmra.mxu0 %v585
    %v596 = vpop.f32.mrf.mxu0
    %v597 = vadd.f32 0.0, %v596
    %v598 = vpop.f32.mrf.mxu0
    %599 = vdwg.mxu0
    %600 = vrot.lane.b32.xlu0 %v380, 104
    %v601 = vpop.permute.xlu0 %600
    %602 = vrot.lane.b32.xlu0 %v270, 104
    %v603 = vpop.permute.xlu0 %602
    %v605 = vsel %vm271, %v601, 0
    %v608 = vsel %vm271, %v603, 0
    %610 = vmatpush.bf16.xpose.msra.mxu0 0
    %611 = vmatpush.bf16.xpose.msra.mxu0 0
    %612 = vmatpush.bf16.xpose.msra.mxu0 0
    %613 = vmatpush.bf16.xpose.msra.mxu0 0
    %614 = vmatpush.bf16.xpose.msra.mxu0 0
    %615 = vmatpush.bf16.xpose.msra.mxu0 0
    %616 = vmatpush.bf16.xpose.msra.mxu0 0
    %617 = vmatpush.bf16.xpose.msra.mxu0 %v608
    %618 = vmatmul.bf16.gmra.mxu0 %v605
    %v619 = vpop.f32.mrf.mxu0
    %v620 = vadd.f32 0.0, %v619
    %v621 = vpop.f32.mrf.mxu0
    %622 = vdwg.mxu0
    %623 = vrot.lane.b32.xlu0 %v406, 104
    %v624 = vpop.permute.xlu0 %623
    %625 = vrot.lane.b32.xlu0 %v295, 104
    %v626 = vpop.permute.xlu0 %625
    %v628 = vsel %vm271, %v624, 0
    %v631 = vsel %vm271, %v626, 0
    %633 = vmatpush.bf16.xpose.msra.mxu0 0
    %634 = vmatpush.bf16.xpose.msra.mxu0 0
    %635 = vmatpush.bf16.xpose.msra.mxu0 0
    %636 = vmatpush.bf16.xpose.msra.mxu0 0
    %637 = vmatpush.bf16.xpose.msra.mxu0 0
    %638 = vmatpush.bf16.xpose.msra.mxu0 0
    %639 = vmatpush.bf16.xpose.msra.mxu0 0
    %640 = vmatpush.bf16.xpose.msra.mxu0 %v631
    %641 = vmatmul.bf16.gmra.mxu0 %v628
    %v642 = vpop.f32.mrf.mxu0
    %v643 = vadd.f32 0.0, %v642
    %v644 = vpop.f32.mrf.mxu0
    %645 = vdwg.mxu0
    %v646 = vsel %vm315, %v620, -inf
    %647 = vmax.xlane.f32.xlu0 %v646
    %v648 = vpop.xlane.xlu0 %647
    %v649 = vsel %vm315, %v643, -inf
    %650 = vmax.xlane.f32.xlu0 %v649
    %v651 = vpop.xlane.xlu0 %650
    %v652 = vsub.f32 %v620, %v648
    %v653 = vsub.f32 %v643, %v651
    %v654 = vmul.f32 %v652, 1.442695
    %v655 = vpow.pop %v654
    %v656 = vmul.f32 %v653, 1.442695
    %v657 = vpow.pop %v656
    %v658 = vsel %vm315, %v655, 0.0
    %659 = vadd.xlane.f32.xlu0 %v658
    %v660 = vpop.xlane.xlu0 %659
    %v661 = vsel %vm315, %v657, 0.0
    %662 = vadd.xlane.f32.xlu0 %v661
    %v663 = vpop.xlane.xlu0 %662
    %v664 = vrcp.pop %v660
    %v665 = vrcp.pop %v663
    %v666 = vmul.f32 %v655, %v664
    %v667 = vmul.f32 %v657, %v665
    %v668 = vpack.c.bf16 %v666, %v666
    %v669 = vpack.c.bf16 %v667, %v667
    %670 = vrot.lane.b32.xlu0 %v270, 72
    %v671 = vpop.permute.xlu0 %670
    %v674 = vsel %vm315, %v668, 0
    %676 = vmatpush.bf16.msra.mxu0 0
    %677 = vmatpush.bf16.msra.mxu0 0
    %678 = vmatpush.bf16.msra.mxu0 0
    %679 = vmatpush.bf16.msra.mxu0 0
    %680 = vmatpush.bf16.msra.mxu0 0
    %681 = vmatpush.bf16.msra.mxu0 0
    %682 = vmatpush.bf16.msra.mxu0 0
    %683 = vmatpush.bf16.msra.mxu0 %v671
    %684 = vmatmul.bf16.gmra.mxu0 %v674
    %v685 = vpop.f32.mrf.mxu0
    %v686 = vadd.f32 0.0, %v685
    %v687 = vpop.f32.mrf.mxu0
    %688 = vdwg.mxu0
    %689 = vrot.lane.b32.xlu0 %v295, 72
    %v690 = vpop.permute.xlu0 %689
    %v693 = vsel %vm315, %v669, 0
    %695 = vmatpush.bf16.msra.mxu0 0
    %696 = vmatpush.bf16.msra.mxu0 0
    %697 = vmatpush.bf16.msra.mxu0 0
    %698 = vmatpush.bf16.msra.mxu0 0
    %699 = vmatpush.bf16.msra.mxu0 0
    %700 = vmatpush.bf16.msra.mxu0 0
    %701 = vmatpush.bf16.msra.mxu0 0
    %702 = vmatpush.bf16.msra.mxu0 %v690
    %703 = vmatmul.bf16.gmra.mxu0 %v693
    %v704 = vpop.f32.mrf.mxu0
    %v705 = vadd.f32 0.0, %v704
    %v706 = vpop.f32.mrf.mxu0
    %707 = vdwg.mxu0
    %710 = vrot.lane.b32.xlu0 %v470, 8
    %v711 = vpop.permute.xlu0 %710
    %712 = vrot.lane.b32.xlu0 %v489, 8
    %v713 = vpop.permute.xlu0 %712
    %718 = vrot.lane.b32.xlu0 %v578, 16
    %v719 = vpop.permute.xlu0 %718
    %720 = vrot.lane.b32.xlu0 %v597, 16
    %v721 = vpop.permute.xlu0 %720
    %726 = vrot.lane.b32.xlu0 %v686, 24
    %v727 = vpop.permute.xlu0 %726
    %728 = vrot.lane.b32.xlu0 %v705, 24
    %v729 = vpop.permute.xlu0 %728
    %v732 = vsel %vm271, %v356, %v711
    %v733 = vsel %vm271, %v375, %v713
    %v734 = vsel %vm315, %v732, %v719
    %v735 = vsel %vm315, %v733, %v721
    %vm736 = vcmask 195584
    %v737 = vsel %vm736, %v734, %v727
    %v738 = vsel %vm736, %v735, %v729
    %v739 = vpack.c.bf16 %v738, %v737
    %v740 = vld [vmem:[#allocation10] sm:$0xf]
    %v741 = vld [vmem:[#allocation10 + $0x4] sm:$0xf]
    %v742 = vld [vmem:[#allocation10 + $0x8] sm:$0xf]
    %v743 = vld [vmem:[#allocation10 + $0xc] sm:$0xf]
    %v744 = vld [vmem:[#allocation11] sm:$0x1]
    %v746 = vperm.slane %v744, 0
    %v752 = vunpack.c.l.b16 %v740
    %v753 = vunpack.c.l.b16 %v741
    %v754 = vunpack.c.l.b16 %v742
    %v755 = vunpack.c.l.b16 %v743
    %v756 = vpack.c.b16 %v753, %v752
    %v757 = vpack.c.b16 %v755, %v754
    %v761 = vsel %vm195, %v739, 0
    %763 = vmatpush.bf16.msra.mxu0 0
    %764 = vmatpush.bf16.msra.mxu0 0
    %765 = vmatpush.bf16.msra.mxu0 0
    %766 = vmatpush.bf16.msra.mxu0 0
    %767 = vmatpush.bf16.msra.mxu0 0
    %768 = vmatpush.bf16.msra.mxu0 0
    %769 = vmatpush.bf16.msra.mxu0 %v757
    %770 = vmatpush.bf16.msra.mxu0 %v756
    %771 = vmatmul.bf16.gmra.mxu0 %v761
    %v772 = vpop.f32.mrf.mxu0
    %v773 = vadd.f32 %v746, %v772
    %v774 = vpop.f32.mrf.mxu0
    %v775 = vadd.f32 %v746, %v774
    %776 = vdwg.mxu0
    %v777 = vld [vmem:[#allocation13] sm:$0xf]
    %v778 = vld [vmem:[#allocation13 + $0x4] sm:$0xf]
    %v779 = vld [vmem:[#allocation13 + $0x8] sm:$0xf]
    %v780 = vld [vmem:[#allocation13 + $0xc] sm:$0xf]
    %v781 = vld [vmem:[#allocation13 + $0x10] sm:$0xf]
    %v782 = vld [vmem:[#allocation13 + $0x14] sm:$0xf]
    %v783 = vld [vmem:[#allocation13 + $0x18] sm:$0xf]
    %v784 = vld [vmem:[#allocation13 + $0x1c] sm:$0xf]
    %v785 = vpack.c.bf16 %v775, %v773
    %v790 = vunpack.c.l.b16 %v781
    %v791 = vunpack.c.l.b16 %v782
    %v792 = vunpack.c.l.b16 %v783
    %v793 = vunpack.c.l.b16 %v784
    %v794 = vpack.c.b16 %v791, %v790
    %v795 = vpack.c.b16 %v793, %v792
    %v799 = vsel %vm195, %v785, 0
    %801 = vmatpush.bf16.msra.mxu0 0
    %802 = vmatpush.bf16.msra.mxu0 0
    %803 = vmatpush.bf16.msra.mxu0 0
    %804 = vmatpush.bf16.msra.mxu0 0
    %805 = vmatpush.bf16.msra.mxu0 0
    %806 = vmatpush.bf16.msra.mxu0 0
    %807 = vmatpush.bf16.msra.mxu0 %v795
    %808 = vmatpush.bf16.msra.mxu0 %v794
    %809 = vmatmul.bf16.gmra.mxu0 %v799
    %v810 = vpop.f32.mrf.mxu0
    %v811 = vadd.f32 0.0, %v810
    %v812 = vpop.f32.mrf.mxu0
    %v813 = vadd.f32 0.0, %v812
    %814 = vdwg.mxu0
    %v819 = vunpack.c.l.b16 %v777
    %v820 = vunpack.c.l.b16 %v778
    %v821 = vunpack.c.l.b16 %v779
    %v822 = vunpack.c.l.b16 %v780
    %v823 = vpack.c.b16 %v820, %v819
    %v824 = vpack.c.b16 %v822, %v821
    %827 = vmatpush.bf16.msra.mxu0 0
    %828 = vmatpush.bf16.msra.mxu0 0
    %829 = vmatpush.bf16.msra.mxu0 0
    %830 = vmatpush.bf16.msra.mxu0 0
    %831 = vmatpush.bf16.msra.mxu0 0
    %832 = vmatpush.bf16.msra.mxu0 0
    %833 = vmatpush.bf16.msra.mxu0 %v824
    %834 = vmatpush.bf16.msra.mxu0 %v823
    %835 = vmatmul.bf16.gmra.mxu0 %v197
    %v836 = vpop.f32.mrf.mxu0
    %v837 = vadd.f32 %v811, %v836
    %v838 = vpop.f32.mrf.mxu0
    %v839 = vadd.f32 %v813, %v838
    %840 = vdwg.mxu0
    %v841 = vld [vmem:[%s9] sm:$0x1]
    %v843 = vperm.slane %v841, 0
    %v845 = vadd.f32 %v837, %v843
    %v846 = vadd.f32 %v839, %v843
    %v847 = vld [vmem:[%s10] sm:$0x1]
    %v848 = vld [vmem:[#allocation14] sm:$0x1]
    %vm849 = vcmask 523264
    %v850 = vsel %vm849, %v845, 0.0
    %851 = vadd.xlane.f32.xlu0 %v850
    %v852 = vpop.xlane.xlu0 %851
    %v853 = vsel %vm849, %v846, 0.0
    %854 = vadd.xlane.f32.xlu0 %v853
    %v855 = vpop.xlane.xlu0 %854
    %v856 = vrcp.pop 64.0
    %v857 = vmul.f32 64.0, %v856
    %v858 = vsub.f32 1.0, %v857
    %v859 = vmul.f32 %v856, %v858
    %v860 = vadd.f32 %v856, %v859
    %vm861 = vweird.f32 %v856
    %v862 = vsel %vm861, %v856, %v860
    %v863 = vmul.f32 %v852, %v862
    %v864 = vmul.f32 %v855, %v862
    %v865 = vsub.f32 %v845, %v863
    %v866 = vsub.f32 %v846, %v864
    %v867 = vmul.f32 %v865, %v865
    %v868 = vmul.f32 %v866, %v866
    %v869 = vsel %vm849, %v867, 0.0
    %870 = vadd.xlane.f32.xlu0 %v869
    %v871 = vpop.xlane.xlu0 %870
    %v872 = vsel %vm849, %v868, 0.0
    %873 = vadd.xlane.f32.xlu0 %v872
    %v874 = vpop.xlane.xlu0 %873
    %v875 = vmul.f32 %v871, %v862
    %v876 = vmul.f32 %v874, %v862
    %v877 = vadd.f32 %v875, 1e-05
    %v878 = vadd.f32 %v876, 1e-05
    %v879 = vrsqrt.pop %v877
    %v880 = vmul.f32 %v879, %v877
    %v881 = vmul.f32 %v880, %v879
    %v882 = vmul.f32 0.5, %v881
    %v883 = vsub.f32 1.5, %v882
    %v884 = vmul.f32 %v879, %v883
    %vm885 = vweird.f32 %v877
    %vm886 = vweird.f32 %v879
    %vm887 = vmor %vm885, %vm886
    %v888 = vsel %vm887, %v879, %v884
    %v889 = vrsqrt.pop %v878
    %v890 = vmul.f32 %v889, %v878
    %v891 = vmul.f32 %v890, %v889
    %v892 = vmul.f32 0.5, %v891
    %v893 = vsub.f32 1.5, %v892
    %v894 = vmul.f32 %v889, %v893
    %vm895 = vweird.f32 %v878
    %vm896 = vweird.f32 %v889
    %vm897 = vmor %vm895, %vm896
    %v898 = vsel %vm897, %v889, %v894
    %v899 = vmul.f32 %v865, %v888
    %v900 = vmul.f32 %v866, %v898
    %v902 = vperm.slane %v847, 0
    %v904 = vmul.f32 %v899, %v902
    %v905 = vmul.f32 %v900, %v902
    %v907 = vperm.slane %v848, 0
    %v909 = vadd.f32 %v904, %v907
    %v910 = vadd.f32 %v905, %v907
    %vm911 = vcmp.gt.f32.partialorder %v909, 0.0
    %vm912 = vcmp.gt.f32.partialorder %v910, 0.0
    %v913 = vmul.f32 %v909, 0.01
    %v914 = vmul.f32 %v910, 0.01
    %v915 = vsel %vm911, %v909, %v913
    %v916 = vsel %vm912, %v910, %v914
    %v917 = vpack.c.bf16 %v916, %v915
    %s918 = scalar_lea.vmem [#allocation13], 32
    %v919 = vld [vmem:[%s918] sm:$0xf]
    %v920 = vld [vmem:[%s918 + $0x4] sm:$0xf]
    %v921 = vld [vmem:[%s918 + $0x8] sm:$0xf]
    %v922 = vld [vmem:[%s918 + $0xc] sm:$0xf]
    %v923 = vld [vmem:[%s918 + $0x10] sm:$0xf]
    %v924 = vld [vmem:[%s918 + $0x14] sm:$0xf]
    %v925 = vld [vmem:[%s918 + $0x18] sm:$0xf]
    %v926 = vld [vmem:[%s918 + $0x1c] sm:$0xf]
    %s927 = scalar_lea.vmem %s9, 1
    %v928 = vld [vmem:[%s927] sm:$0x1]
    %v930 = vperm.slane %v928, 0
    %v940 = vunpack.c.l.b16 %v919
    %v941 = vunpack.c.l.b16 %v920
    %v942 = vunpack.c.l.b16 %v921
    %v943 = vunpack.c.l.b16 %v922
    %v944 = vunpack.c.l.b16 %v923
    %v945 = vunpack.c.l.b16 %v924
    %v946 = vunpack.c.l.b16 %v925
    %v947 = vunpack.c.l.b16 %v926
    %v948 = vpack.c.b16 %v941, %v940
    %v949 = vpack.c.b16 %v943, %v942
    %v950 = vpack.c.b16 %v945, %v944
    %v951 = vpack.c.b16 %v947, %v946
    %v957 = vsel %vm849, %v917, 0
    %959 = vmatpush.bf16.msra.mxu0 0
    %960 = vmatpush.bf16.msra.mxu0 0
    %961 = vmatpush.bf16.msra.mxu0 0
    %962 = vmatpush.bf16.msra.mxu0 0
    %963 = vmatpush.bf16.msra.mxu0 %v951
    %964 = vmatpush.bf16.msra.mxu0 %v950
    %965 = vmatpush.bf16.msra.mxu0 %v949
    %966 = vmatpush.bf16.msra.mxu0 %v948
    %967 = vmatmul.bf16.gmra.mxu0 %v957
    %v968 = vpop.f32.mrf.mxu0
    %v969 = vadd.f32 %v930, %v968
    %v970 = vpop.f32.mrf.mxu0
    %v971 = vadd.f32 %v930, %v970
    %972 = vdwg.mxu0
    %s973 = scalar_lea.vmem %s10, 1
    %v974 = vld [vmem:[%s973] sm:$0x1]
    %s975 = scalar_lea.vmem [#allocation14], 1
    %v976 = vld [vmem:[%s975] sm:$0x1]
    %v977 = vsel %vm849, %v969, 0.0
    %978 = vadd.xlane.f32.xlu0 %v977
    %v979 = vpop.xlane.xlu0 %978
    %v980 = vsel %vm849, %v971, 0.0
    %981 = vadd.xlane.f32.xlu0 %v980
    %v982 = vpop.xlane.xlu0 %981
    %v983 = vmul.f32 %v979, %v862
    %v984 = vmul.f32 %v982, %v862
    %v985 = vsub.f32 %v969, %v983
    %v986 = vsub.f32 %v971, %v984
    %v987 = vmul.f32 %v985, %v985
    %v988 = vmul.f32 %v986, %v986
    %v989 = vsel %vm849, %v987, 0.0
    %990 = vadd.xlane.f32.xlu0 %v989
    %v991 = vpop.xlane.xlu0 %990
    %v992 = vsel %vm849, %v988, 0.0
    %993 = vadd.xlane.f32.xlu0 %v992
    %v994 = vpop.xlane.xlu0 %993
    %v995 = vmul.f32 %v991, %v862
    %v996 = vmul.f32 %v994, %v862
    %v997 = vadd.f32 %v995, 1e-05
    %v998 = vadd.f32 %v996, 1e-05
    %v999 = vrsqrt.pop %v997
    %v1000 = vmul.f32 %v999, %v997
    %v1001 = vmul.f32 %v1000, %v999
    %v1002 = vmul.f32 0.5, %v1001
    %v1003 = vsub.f32 1.5, %v1002
    %v1004 = vmul.f32 %v999, %v1003
    %vm1005 = vweird.f32 %v997
    %vm1006 = vweird.f32 %v999
    %vm1007 = vmor %vm1005, %vm1006
    %v1008 = vsel %vm1007, %v999, %v1004
    %v1009 = vrsqrt.pop %v998
    %v1010 = vmul.f32 %v1009, %v998
    %v1011 = vmul.f32 %v1010, %v1009
    %v1012 = vmul.f32 0.5, %v1011
    %v1013 = vsub.f32 1.5, %v1012
    %v1014 = vmul.f32 %v1009, %v1013
    %vm1015 = vweird.f32 %v998
    %vm1016 = vweird.f32 %v1009
    %vm1017 = vmor %vm1015, %vm1016
    %v1018 = vsel %vm1017, %v1009, %v1014
    %v1019 = vmul.f32 %v985, %v1008
    %v1020 = vmul.f32 %v986, %v1018
    %v1022 = vperm.slane %v974, 0
    %v1024 = vmul.f32 %v1019, %v1022
    %v1025 = vmul.f32 %v1020, %v1022
    %v1027 = vperm.slane %v976, 0
    %v1029 = vadd.f32 %v1024, %v1027
    %v1030 = vadd.f32 %v1025, %v1027
    %vm1031 = vcmp.gt.f32.partialorder %v1029, 0.0
    %vm1032 = vcmp.gt.f32.partialorder %v1030, 0.0
    %v1033 = vmul.f32 %v1029, 0.01
    %v1034 = vmul.f32 %v1030, 0.01
    %v1035 = vsel %vm1031, %v1029, %v1033
    %v1036 = vsel %vm1032, %v1030, %v1034
    %v1037 = vpack.c.bf16 %v1036, %v1035
    %s1038 = scalar_lea.vmem [#allocation13], 64
    %v1039 = vld [vmem:[%s1038] sm:$0xf]
    %v1040 = vld [vmem:[%s1038 + $0x4] sm:$0xf]
    %v1041 = vld [vmem:[%s1038 + $0x8] sm:$0xf]
    %v1042 = vld [vmem:[%s1038 + $0xc] sm:$0xf]
    %v1043 = vld [vmem:[%s1038 + $0x10] sm:$0xf]
    %v1044 = vld [vmem:[%s1038 + $0x14] sm:$0xf]
    %v1045 = vld [vmem:[%s1038 + $0x18] sm:$0xf]
    %v1046 = vld [vmem:[%s1038 + $0x1c] sm:$0xf]
    %s1047 = scalar_lea.vmem %s9, 2
    %v1048 = vld [vmem:[%s1047] sm:$0x1]
    %v1050 = vperm.slane %v1048, 0
    %v1060 = vunpack.c.l.b16 %v1039
    %v1061 = vunpack.c.l.b16 %v1040
    %v1062 = vunpack.c.l.b16 %v1041
    %v1063 = vunpack.c.l.b16 %v1042
    %v1064 = vunpack.c.l.b16 %v1043
    %v1065 = vunpack.c.l.b16 %v1044
    %v1066 = vunpack.c.l.b16 %v1045
    %v1067 = vunpack.c.l.b16 %v1046
    %v1068 = vpack.c.b16 %v1061, %v1060
    %v1069 = vpack.c.b16 %v1063, %v1062
    %v1070 = vpack.c.b16 %v1065, %v1064
    %v1071 = vpack.c.b16 %v1067, %v1066
    %v1077 = vsel %vm849, %v1037, 0
    %1079 = vmatpush.bf16.msra.mxu0 0
    %1080 = vmatpush.bf16.msra.mxu0 0
    %1081 = vmatpush.bf16.msra.mxu0 0
    %1082 = vmatpush.bf16.msra.mxu0 0
    %1083 = vmatpush.bf16.msra.mxu0 %v1071
    %1084 = vmatpush.bf16.msra.mxu0 %v1070
    %1085 = vmatpush.bf16.msra.mxu0 %v1069
    %1086 = vmatpush.bf16.msra.mxu0 %v1068
    %1087 = vmatmul.bf16.gmra.mxu0 %v1077
    %v1088 = vpop.f32.mrf.mxu0
    %v1089 = vadd.f32 %v1050, %v1088
    %v1090 = vpop.f32.mrf.mxu0
    %v1091 = vadd.f32 %v1050, %v1090
    %1092 = vdwg.mxu0
    %s1093 = scalar_lea.vmem %s10, 2
    %v1094 = vld [vmem:[%s1093] sm:$0x1]
    %s1095 = scalar_lea.vmem [#allocation14], 2
    %v1096 = vld [vmem:[%s1095] sm:$0x1]
    %v1097 = vsel %vm849, %v1089, 0.0
    %1098 = vadd.xlane.f32.xlu0 %v1097
    %v1099 = vpop.xlane.xlu0 %1098
    %v1100 = vsel %vm849, %v1091, 0.0
    %1101 = vadd.xlane.f32.xlu0 %v1100
    %v1102 = vpop.xlane.xlu0 %1101
    %v1103 = vmul.f32 %v1099, %v862
    %v1104 = vmul.f32 %v1102, %v862
    %v1105 = vsub.f32 %v1089, %v1103
    %v1106 = vsub.f32 %v1091, %v1104
    %v1107 = vmul.f32 %v1105, %v1105
    %v1108 = vmul.f32 %v1106, %v1106
    %v1109 = vsel %vm849, %v1107, 0.0
    %1110 = vadd.xlane.f32.xlu0 %v1109
    %v1111 = vpop.xlane.xlu0 %1110
    %v1112 = vsel %vm849, %v1108, 0.0
    %1113 = vadd.xlane.f32.xlu0 %v1112
    %v1114 = vpop.xlane.xlu0 %1113
    %v1115 = vmul.f32 %v1111, %v862
    %v1116 = vmul.f32 %v1114, %v862
    %v1117 = vadd.f32 %v1115, 1e-05
    %v1118 = vadd.f32 %v1116, 1e-05
    %v1119 = vrsqrt.pop %v1117
    %v1120 = vmul.f32 %v1119, %v1117
    %v1121 = vmul.f32 %v1120, %v1119
    %v1122 = vmul.f32 0.5, %v1121
    %v1123 = vsub.f32 1.5, %v1122
    %v1124 = vmul.f32 %v1119, %v1123
    %vm1125 = vweird.f32 %v1117
    %vm1126 = vweird.f32 %v1119
    %vm1127 = vmor %vm1125, %vm1126
    %v1128 = vsel %vm1127, %v1119, %v1124
    %v1129 = vrsqrt.pop %v1118
    %v1130 = vmul.f32 %v1129, %v1118
    %v1131 = vmul.f32 %v1130, %v1129
    %v1132 = vmul.f32 0.5, %v1131
    %v1133 = vsub.f32 1.5, %v1132
    %v1134 = vmul.f32 %v1129, %v1133
    %vm1135 = vweird.f32 %v1118
    %vm1136 = vweird.f32 %v1129
    %vm1137 = vmor %vm1135, %vm1136
    %v1138 = vsel %vm1137, %v1129, %v1134
    %v1139 = vmul.f32 %v1105, %v1128
    %v1140 = vmul.f32 %v1106, %v1138
    %v1142 = vperm.slane %v1094, 0
    %v1144 = vmul.f32 %v1139, %v1142
    %v1145 = vmul.f32 %v1140, %v1142
    %v1147 = vperm.slane %v1096, 0
    %v1149 = vadd.f32 %v1144, %v1147
    %v1150 = vadd.f32 %v1145, %v1147
    %vm1151 = vcmp.gt.f32.partialorder %v1149, 0.0
    %vm1152 = vcmp.gt.f32.partialorder %v1150, 0.0
    %v1153 = vmul.f32 %v1149, 0.01
    %v1154 = vmul.f32 %v1150, 0.01
    %v1155 = vsel %vm1151, %v1149, %v1153
    %v1156 = vsel %vm1152, %v1150, %v1154
    %v1157 = vpack.c.bf16 %v1156, %v1155
    %s1158 = scalar_lea.vmem [#allocation13], 96
    %v1159 = vld [vmem:[%s1158] sm:$0xf]
    %v1160 = vld [vmem:[%s1158 + $0x4] sm:$0xf]
    %v1161 = vld [vmem:[%s1158 + $0x8] sm:$0xf]
    %v1162 = vld [vmem:[%s1158 + $0xc] sm:$0xf]
    %v1163 = vld [vmem:[%s1158 + $0x10] sm:$0xf]
    %v1164 = vld [vmem:[%s1158 + $0x14] sm:$0xf]
    %v1165 = vld [vmem:[%s1158 + $0x18] sm:$0xf]
    %v1166 = vld [vmem:[%s1158 + $0x1c] sm:$0xf]
    %s1167 = scalar_lea.vmem %s9, 3
    %v1168 = vld [vmem:[%s1167] sm:$0x1]
    %v1170 = vperm.slane %v1168, 0
    %v1180 = vunpack.c.l.b16 %v1159
    %v1181 = vunpack.c.l.b16 %v1160
    %v1182 = vunpack.c.l.b16 %v1161
    %v1183 = vunpack.c.l.b16 %v1162
    %v1184 = vunpack.c.l.b16 %v1163
    %v1185 = vunpack.c.l.b16 %v1164
    %v1186 = vunpack.c.l.b16 %v1165
    %v1187 = vunpack.c.l.b16 %v1166
    %v1188 = vpack.c.b16 %v1181, %v1180
    %v1189 = vpack.c.b16 %v1183, %v1182
    %v1190 = vpack.c.b16 %v1185, %v1184
    %v1191 = vpack.c.b16 %v1187, %v1186
    %v1197 = vsel %vm849, %v1157, 0
    %1199 = vmatpush.bf16.msra.mxu0 0
    %1200 = vmatpush.bf16.msra.mxu0 0
    %1201 = vmatpush.bf16.msra.mxu0 0
    %1202 = vmatpush.bf16.msra.mxu0 0
    %1203 = vmatpush.bf16.msra.mxu0 %v1191
    %1204 = vmatpush.bf16.msra.mxu0 %v1190
    %1205 = vmatpush.bf16.msra.mxu0 %v1189
    %1206 = vmatpush.bf16.msra.mxu0 %v1188
    %1207 = vmatmul.bf16.gmra.mxu0 %v1197
    %v1208 = vpop.f32.mrf.mxu0
    %v1209 = vadd.f32 %v1170, %v1208
    %v1210 = vpop.f32.mrf.mxu0
    %v1211 = vadd.f32 %v1170, %v1210
    %1212 = vdwg.mxu0
    %s1213 = scalar_lea.vmem %s10, 3
    %v1214 = vld [vmem:[%s1213] sm:$0x1]
    %s1215 = scalar_lea.vmem [#allocation14], 3
    %v1216 = vld [vmem:[%s1215] sm:$0x1]
    %v1217 = vsel %vm849, %v1209, 0.0
    %1218 = vadd.xlane.f32.xlu0 %v1217
    %v1219 = vpop.xlane.xlu0 %1218
    %v1220 = vsel %vm849, %v1211, 0.0
    %1221 = vadd.xlane.f32.xlu0 %v1220
    %v1222 = vpop.xlane.xlu0 %1221
    %v1223 = vmul.f32 %v1219, %v862
    %v1224 = vmul.f32 %v1222, %v862
    %v1225 = vsub.f32 %v1209, %v1223
    %v1226 = vsub.f32 %v1211, %v1224
    %v1227 = vmul.f32 %v1225, %v1225
    %v1228 = vmul.f32 %v1226, %v1226
    %v1229 = vsel %vm849, %v1227, 0.0
    %1230 = vadd.xlane.f32.xlu0 %v1229
    %v1231 = vpop.xlane.xlu0 %1230
    %v1232 = vsel %vm849, %v1228, 0.0
    %1233 = vadd.xlane.f32.xlu0 %v1232
    %v1234 = vpop.xlane.xlu0 %1233
    %v1235 = vmul.f32 %v1231, %v862
    %v1236 = vmul.f32 %v1234, %v862
    %v1237 = vadd.f32 %v1235, 1e-05
    %v1238 = vadd.f32 %v1236, 1e-05
    %v1239 = vrsqrt.pop %v1237
    %v1240 = vmul.f32 %v1239, %v1237
    %v1241 = vmul.f32 %v1240, %v1239
    %v1242 = vmul.f32 0.5, %v1241
    %v1243 = vsub.f32 1.5, %v1242
    %v1244 = vmul.f32 %v1239, %v1243
    %vm1245 = vweird.f32 %v1237
    %vm1246 = vweird.f32 %v1239
    %vm1247 = vmor %vm1245, %vm1246
    %v1248 = vsel %vm1247, %v1239, %v1244
    %v1249 = vrsqrt.pop %v1238
    %v1250 = vmul.f32 %v1249, %v1238
    %v1251 = vmul.f32 %v1250, %v1249
    %v1252 = vmul.f32 0.5, %v1251
    %v1253 = vsub.f32 1.5, %v1252
    %v1254 = vmul.f32 %v1249, %v1253
    %vm1255 = vweird.f32 %v1238
    %vm1256 = vweird.f32 %v1249
    %vm1257 = vmor %vm1255, %vm1256
    %v1258 = vsel %vm1257, %v1249, %v1254
    %v1259 = vmul.f32 %v1225, %v1248
    %v1260 = vmul.f32 %v1226, %v1258
    %v1262 = vperm.slane %v1214, 0
    %v1264 = vmul.f32 %v1259, %v1262
    %v1265 = vmul.f32 %v1260, %v1262
    %v1267 = vperm.slane %v1216, 0
    %v1269 = vadd.f32 %v1264, %v1267
    %v1270 = vadd.f32 %v1265, %v1267
    %vm1271 = vcmp.gt.f32.partialorder %v1269, 0.0
    %vm1272 = vcmp.gt.f32.partialorder %v1270, 0.0
    %v1273 = vmul.f32 %v1269, 0.01
    %v1274 = vmul.f32 %v1270, 0.01
    %v1275 = vsel %vm1271, %v1269, %v1273
    %v1276 = vsel %vm1272, %v1270, %v1274
    %v1277 = vpack.c.bf16 %v1276, %v1275
    %v1278 = vld [vmem:[%s12] sm:$0xf]
    %v1279 = vld [vmem:[%s12 + $0x4] sm:$0xf]
    %v1280 = vld [vmem:[%s12 + $0x8] sm:$0xf]
    %v1281 = vld [vmem:[%s12 + $0xc] sm:$0xf]
    %v1282 = vld [vmem:[%s12 + $0x10] sm:$0xf]
    %v1283 = vld [vmem:[%s12 + $0x14] sm:$0xf]
    %v1284 = vld [vmem:[%s12 + $0x18] sm:$0xf]
    %v1285 = vld [vmem:[%s12 + $0x1c] sm:$0xf]
    %v1286 = vld [vmem:[%s13] sm:$0x1]
    %v1288 = vperm.slane %v1286, 0
    %v1298 = vunpack.c.l.b16 %v1278
    %v1299 = vunpack.c.l.b16 %v1279
    %v1300 = vunpack.c.l.b16 %v1280
    %v1301 = vunpack.c.l.b16 %v1281
    %v1302 = vunpack.c.l.b16 %v1282
    %v1303 = vunpack.c.l.b16 %v1283
    %v1304 = vunpack.c.l.b16 %v1284
    %v1305 = vunpack.c.l.b16 %v1285
    %v1306 = vpack.c.b16 %v1299, %v1298
    %v1307 = vpack.c.b16 %v1301, %v1300
    %v1308 = vpack.c.b16 %v1303, %v1302
    %v1309 = vpack.c.b16 %v1305, %v1304
    %v1315 = vsel %vm849, %v1277, 0
    %1317 = vmatpush.bf16.msra.mxu0 0
    %1318 = vmatpush.bf16.msra.mxu0 0
    %1319 = vmatpush.bf16.msra.mxu0 0
    %1320 = vmatpush.bf16.msra.mxu0 0
    %1321 = vmatpush.bf16.msra.mxu0 %v1309
    %1322 = vmatpush.bf16.msra.mxu0 %v1308
    %1323 = vmatpush.bf16.msra.mxu0 %v1307
    %1324 = vmatpush.bf16.msra.mxu0 %v1306
    %1325 = vmatmul.bf16.gmra.mxu0 %v1315
    %v1326 = vpop.f32.mrf.mxu0
    %v1327 = vadd.f32 %v1288, %v1326
    %v1328 = vpop.f32.mrf.mxu0
    %v1329 = vadd.f32 %v1288, %v1328
    %1330 = vdwg.mxu0
    %1331 = vst.msk [vmem:[#allocation16] sm:$0xff] %vm195, %v1327
    %1332 = vst.msk [vmem:[#allocation16 + $0x8] sm:$0xff] %vm195, %v1329
    // Predicated region
    $region90: #{tpu_custom_call.1} parent=1 // pred_check
      _
    $region91: #{tpu_custom_call.1} parent=1 // pred_check_branch
      %1334 = sbr.rel (0) target = $region93
    $region92: #{tpu_custom_call.1} parent=1 // pred_region
      %1336 = vsyncadd [#allocation4], 0
      %s1337 = sshll.u32 [#allocation16], 4
      %s1338 = int_to_ptr.vmem [resolvable:$true] %s1337
      %s1339 = sshll.u32 %s14, 4
      %s1340 = int_to_ptr.hbm [resolvable:$true] %s1339
      %1345 = dma.vmem_to_hbm [thread:$0]  %s1338, 256, %s1340, [#allocation4], 128, 128, 8
    $region93: #{tpu_custom_call.1} parent=1 // pred_fallthru
      _
    // Predicated region
    $region94: #{tpu_custom_call.1} parent=1 // pred_check
      _
    $region95: #{tpu_custom_call.1} parent=1 // pred_check_branch
      %1347 = sbr.rel (0) target = $region97
    $region96: #{tpu_custom_call.1} parent=1 // pred_region
      %1349 = dma.done [#allocation4], 256
    $region97: #{tpu_custom_call.1} parent=1 // pred_fallthru
      _
    %1350 = vsyncpa [#allocation3], 1
    %1351 = vsyncpa [#allocation6], 1
    %1352 = vsyncpa [#allocation9], 1
    %1353 = vsyncpa [#allocation12], 1
    %1354 = vsyncpa [#allocation15], 1
    %1355 = vsyncpa [#allocation4], 1

</llo_original>
